<compile_context>
chip_gen: v7x
topology: tpu7x:2x2x1
jax: 0.10.0
libtpu: 0.0.40
codegen_flags: <defaults>
</compile_context>

<pallas_src>
import functools

import jax
import jax.numpy as jnp
import numpy as np
from jax.experimental import pallas as pl
from jax.experimental.pallas import tpu as pltpu

BN_EPS = 1e-5


def _round_up(x, m):
    return (x + m - 1) // m * m


# --------------------------- chip-aware tiling ------------------------------ #

def _chip_config():
    """Returns (vmem_budget_bytes, mxu_n, dual_tensorcore) for the local TPU."""
    kind = ""
    try:
        kind = jax.devices()[0].device_kind.lower()
    except Exception:
        pass
    vmem_cap = None
    try:
        vmem_cap = int(getattr(pltpu.get_tpu_info(), "vmem_capacity_bytes"))
    except Exception:
        vmem_cap = None
    if not vmem_cap or vmem_cap <= 0:
        vmem_cap = (64 << 20) if "v7" in kind else (128 << 20)
    # MXU native N width: 128 lanes up to v5, 256 on v6e / v7x.
    narrow = any(("v%d" % g) in kind for g in (2, 3, 4, 5))
    mxu_n = 128 if narrow else 256
    dual_tc = "v7" in kind
    # 75% of physical VMEM leaves headroom for Mosaic internal scratch.
    budget = min(int(0.75 * vmem_cap), 100 << 20)
    return budget, mxu_n, dual_tc


_VMEM_BUDGET, _MXU_N, _DUAL_TC = _chip_config()


def _largest_tile_dividing(kp, cap):
    """Largest divisor of kp that is a multiple of 128 and <= cap (kp % 128 == 0)."""
    units = kp // 128
    cap_units = max(1, cap // 128)
    best = 1
    d = 1
    while d * d <= units:
        if units % d == 0:
            for c in (d, units // d):
                if best < c <= cap_units:
                    best = c
        d += 1
    return best * 128


def _pipeline_bytes(tm, tk, tn, has_res, out_bytes):
    b = 2 * tm * tk * 2           # A tiles, double-buffered bf16
    b += 2 * tk * tn * 2          # B tiles, double-buffered bf16
    b += 2 * tm * tn * out_bytes  # output tiles, double-buffered
    b += tm * tn * 4              # f32 accumulator scratch
    b += tn * 4                   # shift (single-buffered f32)
    if has_res:
        b += tm * tn * 2          # residual (single-buffered bf16)
    return b


def _select_tiles(M, K, N, has_res, out_bytes):
    Kp = _round_up(K, 128)
    # Lane-dense N tile; fill the full 256-wide MXU on v6e/v7x for wide layers.
    tn = 256 if (_MXU_N >= 256 and N >= 256) else 128
    Np = _round_up(N, tn)
    tm = min(512, _round_up(M, 16))
    tk_cap = 1024
    tk = _largest_tile_dividing(Kp, tk_cap)
    # Shrink until the pipeline fits the per-generation VMEM budget.
    while _pipeline_bytes(tm, tk, tn, has_res, out_bytes) > _VMEM_BUDGET:
        if tk > 128:
            tk_cap //= 2
            tk = _largest_tile_dividing(Kp, tk_cap)
        elif tm > 128:
            tm = max(128, _round_up(tm // 2, 16))
        elif tn > 128:
            tn = 128
            Np = _round_up(N, tn)
        else:
            break
    # Dual-TensorCore chips (v7x): make sure >= 2 "parallel" grid blocks exist.
    if _DUAL_TC and (Np // tn) == 1 and _round_up(M, tm) // tm < 2 and M >= 64:
        tm = min(tm, _round_up(-(-M // 2), 16))
    Mp = _round_up(M, tm)
    return tm, tk, tn, Mp, Kp, Np


# ----------------------------- Pallas kernels ------------------------------ #

def _mm_bias_act_kernel(a_ref, b_ref, shift_ref, o_ref, acc_ref, *, apply_relu):
    @pl.when(pl.program_id(2) == 0)
    def _init():
        acc_ref[...] = jnp.zeros_like(acc_ref)

    acc_ref[...] += jnp.dot(a_ref[...], b_ref[...],
                            preferred_element_type=jnp.float32)

    @pl.when(pl.program_id(2) == pl.num_programs(2) - 1)
    def _epilogue():
        out = acc_ref[...] + shift_ref[...]
        if apply_relu:
            out = jnp.maximum(out, 0.0)
        o_ref[...] = out.astype(o_ref.dtype)


def _mm_bias_res_act_kernel(a_ref, b_ref, shift_ref, res_ref, o_ref, acc_ref, *,
                            apply_relu):
    @pl.when(pl.program_id(2) == 0)
    def _init():
        acc_ref[...] = jnp.zeros_like(acc_ref)

    acc_ref[...] += jnp.dot(a_ref[...], b_ref[...],
                            preferred_element_type=jnp.float32)

    @pl.when(pl.program_id(2) == pl.num_programs(2) - 1)
    def _epilogue():
        out = acc_ref[...] + shift_ref[...] + res_ref[...].astype(jnp.float32)
        if apply_relu:
            out = jnp.maximum(out, 0.0)
        o_ref[...] = out.astype(o_ref.dtype)


def _spec(shape, index_map, single_buffer=False):
    if single_buffer:
        try:
            # Block index is constant across the k sweep -> one buffer suffices.
            return pl.BlockSpec(shape, index_map, pipeline_mode=pl.Buffered(1))
        except Exception:
            return pl.BlockSpec(shape, index_map)
    return pl.BlockSpec(shape, index_map)


def fused_matmul_bias_act(a, b, shift, residual=None, apply_relu=True,
                          out_dtype=jnp.bfloat16):
    """out = maybe_relu(a @ b + shift [+ residual]); bf16 MXU, f32 accumulate."""
    M, K = a.shape
    K2, N = b.shape
    assert K == K2
    out_bytes = jnp.dtype(out_dtype).itemsize
    has_res = residual is not None
    tm, tk, tn, Mp, Kp, Np = _select_tiles(M, K, N, has_res, out_bytes)

    a_p = a.astype(jnp.bfloat16)
    if (Mp, Kp) != (M, K):
        a_p = jnp.pad(a_p, ((0, Mp - M), (0, Kp - K)))
    b_p = b.astype(jnp.bfloat16)
    if (Kp, Np) != (K, N):
        b_p = jnp.pad(b_p, ((0, Kp - K), (0, Np - N)))
    shift_p = shift.astype(jnp.float32)
    if Np != N:
        shift_p = jnp.pad(shift_p, (0, Np - N))
    shift_p = shift_p.reshape(1, Np)

    grid = (Mp // tm, Np // tn, Kp // tk)

    in_specs = [
        _spec((tm, tk), lambda i, j, k: (i, k)),                       # patches
        _spec((tk, tn), lambda i, j, k: (k, j)),                       # weights
        _spec((1, tn), lambda i, j, k: (0, j), single_buffer=True),    # BN shift
    ]
    args = [a_p, b_p, shift_p]
    bytes_accessed = a_p.size * 2 + b_p.size * 2 + shift_p.size * 4 + Mp * Np * out_bytes

    if has_res:
        res_p = residual.astype(jnp.bfloat16)
        if (Mp, Np) != res_p.shape:
            res_p = jnp.pad(res_p, ((0, Mp - M), (0, Np - N)))
        in_specs.append(_spec((tm, tn), lambda i, j, k: (i, j), single_buffer=True))
        args.append(res_p)
        bytes_accessed += res_p.size * 2
        kernel = functools.partial(_mm_bias_res_act_kernel, apply_relu=apply_relu)
    else:
        kernel = functools.partial(_mm_bias_act_kernel, apply_relu=apply_relu)

    blk_bytes = _pipeline_bytes(tm, tk, tn, has_res, out_bytes)
    vmem_limit = int(min(_VMEM_BUDGET, max(16 << 20, blk_bytes + (8 << 20))))

    out = pl.pallas_call(
        kernel,
        out_shape=jax.ShapeDtypeStruct((Mp, Np), out_dtype),
        grid=grid,
        in_specs=in_specs,
        out_specs=pl.BlockSpec((tm, tn), lambda i, j, k: (i, j)),
        scratch_shapes=[pltpu.VMEM((tm, tn), jnp.float32)],
        compiler_params=pltpu.CompilerParams(
            dimension_semantics=("parallel", "parallel", "arbitrary"),
            vmem_limit_bytes=vmem_limit,
        ),
        cost_estimate=pl.CostEstimate(
            flops=2 * Mp * Np * Kp,
            transcendentals=0,
            bytes_accessed=int(bytes_accessed),
        ),
    )(*args)
    if (Mp, Np) != (M, N):
        out = out[:M, :N]
    return out


# ------------------------------ JAX glue ----------------------------------- #

def im2col(x, kh, kw, stride, padding):
    """x: [B, H, W, C] -> bf16 patches [B*Ho*Wo, kh*kw*C] (kh-major, kw, C-fastest)."""
    B, H, W, C = x.shape
    x = x.astype(jnp.bfloat16)            # cast once, before the 9x slicing
    if padding:
        x = jnp.pad(x, ((0, 0), (padding, padding), (padding, padding), (0, 0)))
    Ho = (H + 2 * padding - kh) // stride + 1
    Wo = (W + 2 * padding - kw) // stride + 1
    patches = []
    for i in range(kh):
        for j in range(kw):
            patches.append(x[:, i:i + stride * Ho:stride,
                             j:j + stride * Wo:stride, :])
    p = patches[0] if len(patches) == 1 else jnp.concatenate(patches, axis=-1)
    return p.reshape(B * Ho * Wo, kh * kw * C), (B, Ho, Wo)


def _fold_bn(w_mat, bn):
    """Fold BN scale into weight columns (f32), return folded weights + shift."""
    scale = bn['gamma'] / jnp.sqrt(bn['var'] + BN_EPS)
    shift = bn['beta'] - bn['mean'] * scale
    return w_mat * scale[None, :], shift


def conv_bn_act(x, w, bn, stride, relu, residual=None, padding=1,
                out_dtype=jnp.bfloat16):
    """Conv2d(bias=False) + BatchNorm2d (+ residual) (+ ReLU), NHWC."""
    cout, cin, kh, kw = w.shape
    a, (B, Ho, Wo) = im2col(x, kh, kw, stride, padding)
    bmat = jnp.transpose(w, (2, 3, 1, 0)).reshape(kh * kw * cin, cout)
    bmat, shift = _fold_bn(bmat, bn)
    res = residual.reshape(B * Ho * Wo, cout) if residual is not None else None
    out = fused_matmul_bias_act(a, bmat, shift, res, relu, out_dtype)
    return out.reshape(B, Ho, Wo, cout)


def residual_block_forward(params, x_nchw, *, stride):
    """NCHW in / NCHW out, matching PyTorch ResidualBlock.forward."""
    x = jnp.transpose(x_nchw, (0, 2, 3, 1))                  # NCHW -> NHWC
    h = conv_bn_act(x, params['w1'], params['bn1'], stride=stride, relu=True,
                    padding=1)
    if 'w_sc' in params:
        sc = conv_bn_act(x, params['w_sc'], params['bn_sc'], stride=stride,
                         relu=False, padding=0)
    else:
        sc = x.astype(jnp.bfloat16)
    # second conv fuses: conv + BN + shortcut-add + ReLU in one kernel call
    out = conv_bn_act(h, params['w2'], params['bn2'], stride=1, relu=True,
                      residual=sc, padding=1, out_dtype=jnp.float32)
    return jnp.transpose(out, (0, 3, 1, 2))                  # NHWC -> NCHW


# ------------------------- plain-JAX reference ------------------------------ #

def reference_block(params, x_nchw, *, stride):
    """lax.conv reference with the same bf16 quantization points as the kernel."""
    def conv_bn(x, w, bn, s, pad):
        scale = bn['gamma'] / jnp.sqrt(bn['var'] + BN_EPS)
        shift = bn['beta'] - bn['mean'] * scale
        w_hwio = jnp.transpose(w, (2, 3, 1, 0)) * scale[None, None, None, :]
        y = jax.lax.conv_general_dilated(
            x.astype(jnp.bfloat16), w_hwio.astype(jnp.bfloat16),
            window_strides=(s, s), padding=[(pad, pad), (pad, pad)],
            dimension_numbers=('NHWC', 'HWIO', 'NHWC'),
            preferred_element_type=jnp.float32)
        return y + shift[None, None, None, :]

    x = jnp.transpose(x_nchw, (0, 2, 3, 1))
    h = jnp.maximum(conv_bn(x, params['w1'], params['bn1'], stride, 1), 0.0)
    h = h.astype(jnp.bfloat16)
    if 'w_sc' in params:
        sc = conv_bn(x, params['w_sc'], params['bn_sc'], stride, 0)
        sc = sc.astype(jnp.bfloat16)
    else:
        sc = x.astype(jnp.bfloat16)
    out = conv_bn(h, params['w2'], params['bn2'], 1, 1) + sc.astype(jnp.float32)
    out = jnp.maximum(out, 0.0)
    return jnp.transpose(out, (0, 3, 1, 2))


# --------------------------- deterministic init ----------------------------- #

def init_block_params(key, inch, outch, stride):
    keys = iter(jax.random.split(key, 16))

    def conv_w(cout, cin, k):
        fan_in = cin * k * k
        return jax.random.normal(next(keys), (cout, cin, k, k), jnp.float32) * \
            jnp.sqrt(2.0 / fan_in)

    def bn_p(c):
        return dict(
            gamma=1.0 + 0.1 * jax.random.normal(next(keys), (c,), jnp.float32),
            beta=0.1 * jax.random.normal(next(keys), (c,), jnp.float32),
            mean=0.1 * jax.random.normal(next(keys), (c,), jnp.float32),
            var=1.0 + 0.1 * jax.random.uniform(next(keys), (c,), jnp.float32),
        )

    p = {'w1': conv_w(outch, inch, 3), 'bn1': bn_p(outch),
         'w2': conv_w(outch, outch, 3), 'bn2': bn_p(outch)}
    if stride != 1 or inch != outch:
        p['w_sc'] = conv_w(outch, inch, 1)
        p['bn_sc'] = bn_p(outch)
    return p


# --------------------------------- main ------------------------------------- #

if __name__ == "__main__":
    key = jax.random.PRNGKey(0)
    kx, kp1, kp2 = jax.random.split(key, 3)
    # PyTorch-style NCHW input.
    x = jax.random.normal(kx, (2, 4, 16, 16), jnp.float32)

    # Block A: identity shortcut (inchannel == outchannel, stride == 1).
    p_id = init_block_params(kp1, inch=4, outch=4, stride=1)
    # Block B: projection shortcut (1x1 conv + BN; channel change + stride 2).
    p_proj = init_block_params(kp2, inch=4, outch=8, stride=2)

    fwd = jax.jit(residual_block_forward, static_argnames="stride")
    y1 = fwd(p_id, x, stride=1)
    y2 = fwd(p_proj, x, stride=2)
    jax.block_until_ready((y1, y2))

    assert y1.shape == (2, 4, 16, 16) and y1.dtype == jnp.float32
    assert y2.shape == (2, 8, 8, 8) and y2.dtype == jnp.float32

    r1 = np.asarray(reference_block(p_id, x, stride=1), np.float32)
    r2 = np.asarray(reference_block(p_proj, x, stride=2), np.float32)
    assert np.max(np.abs(np.asarray(y1, np.float32) - r1)) < 5e-2
    assert np.max(np.abs(np.asarray(y2, np.float32) - r2)) < 5e-2

    print("KERNEL_OK")
</pallas_src>

<mosaic_0001>
module attributes {stable_mosaic.version = 11 : i64} {
  func.func @_mm_bias_act_kernel(%arg0: i32, %arg1: i32, %arg2: i32, %arg3: memref<512x128xbf16, #tpu.memory_space<vmem>>, %arg4: memref<128x128xbf16, #tpu.memory_space<vmem>>, %arg5: memref<1x128xf32, #tpu.memory_space<vmem>>, %arg6: memref<512x128xbf16, #tpu.memory_space<vmem>>, %arg7: memref<512x128xf32, #tpu.memory_space<vmem>>) attributes {dimension_semantics = [#tpu.dimension_semantics<parallel>, #tpu.dimension_semantics<parallel>, #tpu.dimension_semantics<arbitrary>], iteration_bounds = array<i64: 1, 1, 1>, scalar_prefetch = 0 : i64, scratch_operands = 1 : i64, tpu.core_type = #tpu.core_type<tc>, window_params = [{transform_indices = @transform_0, window_bounds = array<i64: 512, 128>}, {transform_indices = @transform_1, window_bounds = array<i64: 128, 128>}, {pipeline_mode = #tpu.pipeline_mode<synchronous>, transform_indices = @transform_2, window_bounds = array<i64: 1, 128>}, {transform_indices = @transform_3, window_bounds = array<i64: 512, 128>}]} {
    %c0_i32 = arith.constant 0 : i32
    %0 = arith.cmpi eq, %arg2, %c0_i32 : i32
    %1 = arith.extui %0 : i1 to i32
    %c0_i32_0 = arith.constant 0 : i32
    %2 = arith.cmpi ne, %1, %c0_i32_0 : i32
    scf.if %2 {
      %cst_10 = arith.constant 0.000000e+00 : f32
      %12 = vector.broadcast %cst_10 : f32 to vector<512x128xf32>
      %c0_11 = arith.constant 0 : index
      %c0_12 = arith.constant 0 : index
      %13 = vector.load %arg7[%c0_11, %c0_12] : memref<512x128xf32, #tpu.memory_space<vmem>>, vector<512x128xf32>
      tpu.vector_store %arg7[%c0_11, %c0_12], %12 {strides = array<i32>} : memref<512x128xf32, #tpu.memory_space<vmem>>, vector<512x128xf32>,
    } else {
    }
    %c0 = arith.constant 0 : index
    %c0_1 = arith.constant 0 : index
    %3 = vector.load %arg7[%c0, %c0_1] : memref<512x128xf32, #tpu.memory_space<vmem>>, vector<512x128xf32>
    %c0_2 = arith.constant 0 : index
    %c0_3 = arith.constant 0 : index
    %4 = vector.load %arg3[%c0_2, %c0_3] : memref<512x128xbf16, #tpu.memory_space<vmem>>, vector<512x128xbf16>
    %c0_4 = arith.constant 0 : index
    %c0_5 = arith.constant 0 : index
    %5 = vector.load %arg4[%c0_4, %c0_5] : memref<128x128xbf16, #tpu.memory_space<vmem>>, vector<128x128xbf16>
    %cst = arith.constant dense<0.000000e+00> : vector<512x128xf32>
    %6 = tpu.matmul %4, %5, %cst {dimension_numbers = #tpu.dot_dimension_numbers<[1], [0], [0], [1], [0, 0, 1, 1], [], []>} : vector<512x128xbf16>, vector<128x128xbf16>, vector<512x128xf32> -> vector<512x128xf32>
    %7 = arith.addf %3, %6 : vector<512x128xf32>
    %c0_6 = arith.constant 0 : index
    %c0_7 = arith.constant 0 : index
    %8 = vector.load %arg7[%c0_6, %c0_7] : memref<512x128xf32, #tpu.memory_space<vmem>>, vector<512x128xf32>
    tpu.vector_store %arg7[%c0_6, %c0_7], %7 {strides = array<i32>} : memref<512x128xf32, #tpu.memory_space<vmem>>, vector<512x128xf32>,
    %c0_i32_8 = arith.constant 0 : i32
    %9 = arith.cmpi eq, %arg2, %c0_i32_8 : i32
    %10 = arith.extui %9 : i1 to i32
    %c0_i32_9 = arith.constant 0 : i32
    %11 = arith.cmpi ne, %10, %c0_i32_9 : i32
    scf.if %11 {
      %c0_10 = arith.constant 0 : index
      %c0_11 = arith.constant 0 : index
      %12 = vector.load %arg7[%c0_10, %c0_11] : memref<512x128xf32, #tpu.memory_space<vmem>>, vector<512x128xf32>
      %c0_12 = arith.constant 0 : index
      %c0_13 = arith.constant 0 : index
      %13 = vector.load %arg5[%c0_12, %c0_13] : memref<1x128xf32, #tpu.memory_space<vmem>>, vector<1x128xf32>
      %14 = vector.broadcast %13 : vector<1x128xf32> to vector<512x128xf32>
      %15 = arith.addf %12, %14 : vector<512x128xf32>
      %cst_14 = arith.constant 0.000000e+00 : f32
      %16 = vector.broadcast %cst_14 : f32 to vector<512x128xf32>
      %17 = arith.maximumf %15, %16 : vector<512x128xf32>
      %18 = arith.truncf %17 : vector<512x128xf32> to vector<512x128xbf16>
      %c0_15 = arith.constant 0 : index
      %c0_16 = arith.constant 0 : index
      %19 = vector.load %arg6[%c0_15, %c0_16] : memref<512x128xbf16, #tpu.memory_space<vmem>>, vector<512x128xbf16>
      tpu.vector_store %arg6[%c0_15, %c0_16], %18 {strides = array<i32>} : memref<512x128xbf16, #tpu.memory_space<vmem>>, vector<512x128xbf16>,
    } else {
    }
    return
  }
  func.func @transform_0(%arg0: i32, %arg1: i32, %arg2: i32) -> (i32, i32) {
    %c0_i32 = arith.constant 0 : i32
    return %arg0, %arg2 : i32, i32
  }
  func.func @transform_1(%arg0: i32, %arg1: i32, %arg2: i32) -> (i32, i32) {
    %c0_i32 = arith.constant 0 : i32
    return %arg2, %arg1 : i32, i32
  }
  func.func @transform_2(%arg0: i32, %arg1: i32, %arg2: i32) -> (i32, i32) {
    %c0_i32 = arith.constant 0 : i32
    %c0_i32_0 = arith.constant 0 : i32
    return %c0_i32, %arg1 : i32, i32
  }
  func.func @transform_3(%arg0: i32, %arg1: i32, %arg2: i32) -> (i32, i32) {
    %c0_i32 = arith.constant 0 : i32
    return %arg0, %arg1 : i32, i32
  }
}

module attributes {stable_mosaic.version = 11 : i64} {
  func.func @_mm_bias_res_act_kernel(%arg0: i32, %arg1: i32, %arg2: i32, %arg3: memref<512x128xbf16, #tpu.memory_space<vmem>>, %arg4: memref<128x128xbf16, #tpu.memory_space<vmem>>, %arg5: memref<1x128xf32, #tpu.memory_space<vmem>>, %arg6: memref<512x128xbf16, #tpu.memory_space<vmem>>, %arg7: memref<512x128xf32, #tpu.memory_space<vmem>>, %arg8: memref<512x128xf32, #tpu.memory_space<vmem>>) attributes {dimension_semantics = [#tpu.dimension_semantics<parallel>, #tpu.dimension_semantics<parallel>, #tpu.dimension_semantics<arbitrary>], iteration_bounds = array<i64: 1, 1, 1>, scalar_prefetch = 0 : i64, scratch_operands = 1 : i64, tpu.core_type = #tpu.core_type<tc>, window_params = [{transform_indices = @transform_0, window_bounds = array<i64: 512, 128>}, {transform_indices = @transform_1, window_bounds = array<i64: 128, 128>}, {pipeline_mode = #tpu.pipeline_mode<synchronous>, transform_indices = @transform_2, window_bounds = array<i64: 1, 128>}, {pipeline_mode = #tpu.pipeline_mode<synchronous>, transform_indices = @transform_3, window_bounds = array<i64: 512, 128>}, {transform_indices = @transform_4, window_bounds = array<i64: 512, 128>}]} {
    %c0_i32 = arith.constant 0 : i32
    %0 = arith.cmpi eq, %arg2, %c0_i32 : i32
    %1 = arith.extui %0 : i1 to i32
    %c0_i32_0 = arith.constant 0 : i32
    %2 = arith.cmpi ne, %1, %c0_i32_0 : i32
    scf.if %2 {
      %cst_10 = arith.constant 0.000000e+00 : f32
      %12 = vector.broadcast %cst_10 : f32 to vector<512x128xf32>
      %c0_11 = arith.constant 0 : index
      %c0_12 = arith.constant 0 : index
      %13 = vector.load %arg8[%c0_11, %c0_12] : memref<512x128xf32, #tpu.memory_space<vmem>>, vector<512x128xf32>
      tpu.vector_store %arg8[%c0_11, %c0_12], %12 {strides = array<i32>} : memref<512x128xf32, #tpu.memory_space<vmem>>, vector<512x128xf32>,
    } else {
    }
    %c0 = arith.constant 0 : index
    %c0_1 = arith.constant 0 : index
    %3 = vector.load %arg8[%c0, %c0_1] : memref<512x128xf32, #tpu.memory_space<vmem>>, vector<512x128xf32>
    %c0_2 = arith.constant 0 : index
    %c0_3 = arith.constant 0 : index
    %4 = vector.load %arg3[%c0_2, %c0_3] : memref<512x128xbf16, #tpu.memory_space<vmem>>, vector<512x128xbf16>
    %c0_4 = arith.constant 0 : index
    %c0_5 = arith.constant 0 : index
    %5 = vector.load %arg4[%c0_4, %c0_5] : memref<128x128xbf16, #tpu.memory_space<vmem>>, vector<128x128xbf16>
    %cst = arith.constant dense<0.000000e+00> : vector<512x128xf32>
    %6 = tpu.matmul %4, %5, %cst {dimension_numbers = #tpu.dot_dimension_numbers<[1], [0], [0], [1], [0, 0, 1, 1], [], []>} : vector<512x128xbf16>, vector<128x128xbf16>, vector<512x128xf32> -> vector<512x128xf32>
    %7 = arith.addf %3, %6 : vector<512x128xf32>
    %c0_6 = arith.constant 0 : index
    %c0_7 = arith.constant 0 : index
    %8 = vector.load %arg8[%c0_6, %c0_7] : memref<512x128xf32, #tpu.memory_space<vmem>>, vector<512x128xf32>
    tpu.vector_store %arg8[%c0_6, %c0_7], %7 {strides = array<i32>} : memref<512x128xf32, #tpu.memory_space<vmem>>, vector<512x128xf32>,
    %c0_i32_8 = arith.constant 0 : i32
    %9 = arith.cmpi eq, %arg2, %c0_i32_8 : i32
    %10 = arith.extui %9 : i1 to i32
    %c0_i32_9 = arith.constant 0 : i32
    %11 = arith.cmpi ne, %10, %c0_i32_9 : i32
    scf.if %11 {
      %c0_10 = arith.constant 0 : index
      %c0_11 = arith.constant 0 : index
      %12 = vector.load %arg8[%c0_10, %c0_11] : memref<512x128xf32, #tpu.memory_space<vmem>>, vector<512x128xf32>
      %c0_12 = arith.constant 0 : index
      %c0_13 = arith.constant 0 : index
      %13 = vector.load %arg5[%c0_12, %c0_13] : memref<1x128xf32, #tpu.memory_space<vmem>>, vector<1x128xf32>
      %14 = vector.broadcast %13 : vector<1x128xf32> to vector<512x128xf32>
      %15 = arith.addf %12, %14 : vector<512x128xf32>
      %c0_14 = arith.constant 0 : index
      %c0_15 = arith.constant 0 : index
      %16 = vector.load %arg6[%c0_14, %c0_15] : memref<512x128xbf16, #tpu.memory_space<vmem>>, vector<512x128xbf16>
      %17 = arith.extf %16 : vector<512x128xbf16> to vector<512x128xf32>
      %18 = arith.addf %15, %17 : vector<512x128xf32>
      %cst_16 = arith.constant 0.000000e+00 : f32
      %19 = vector.broadcast %cst_16 : f32 to vector<512x128xf32>
      %20 = arith.maximumf %18, %19 : vector<512x128xf32>
      %c0_17 = arith.constant 0 : index
      %c0_18 = arith.constant 0 : index
      %21 = vector.load %arg7[%c0_17, %c0_18] : memref<512x128xf32, #tpu.memory_space<vmem>>, vector<512x128xf32>
      tpu.vector_store %arg7[%c0_17, %c0_18], %20 {strides = array<i32>} : memref<512x128xf32, #tpu.memory_space<vmem>>, vector<512x128xf32>,
    } else {
    }
    return
  }
  func.func @transform_0(%arg0: i32, %arg1: i32, %arg2: i32) -> (i32, i32) {
    %c0_i32 = arith.constant 0 : i32
    return %arg0, %arg2 : i32, i32
  }
  func.func @transform_1(%arg0: i32, %arg1: i32, %arg2: i32) -> (i32, i32) {
    %c0_i32 = arith.constant 0 : i32
    return %arg2, %arg1 : i32, i32
  }
  func.func @transform_2(%arg0: i32, %arg1: i32, %arg2: i32) -> (i32, i32) {
    %c0_i32 = arith.constant 0 : i32
    %c0_i32_0 = arith.constant 0 : i32
    return %c0_i32, %arg1 : i32, i32
  }
  func.func @transform_3(%arg0: i32, %arg1: i32, %arg2: i32) -> (i32, i32) {
    %c0_i32 = arith.constant 0 : i32
    return %arg0, %arg1 : i32, i32
  }
  func.func @transform_4(%arg0: i32, %arg1: i32, %arg2: i32) -> (i32, i32) {
    %c0_i32 = arith.constant 0 : i32
    return %arg0, %arg1 : i32, i32
  }
}

</mosaic_0001>

<llo_original>
// kernel: residual_block_forward.2
$region0: #{residual_block_forward.2}
  #allocation0 [shape = 'u32[]', space=smem, size = 0x4, offset = 0x4, fixed_abs, tag = 'smem constant byte address 0x4 - core index']
  #allocation1 [shape = 'u32[144,128]{1,0:T(1,128)}', space=vmem, size = 0x12000, scoped, tag = 'internal scratch']
  #allocation2 [shape = 'f32[512,128]{1,0:T(8,128)}', space=vmem, size = 0x40000, scoped, tag = 'scratch operand']
  %s0 = inlined_call_operand.vmem [shape: bf16[512,128], index: 0, kind: input, shape index: {}]
  %s1 = inlined_call_operand.vmem [shape: bf16[128,128], index: 1, kind: input, shape index: {}]
  %s2 = inlined_call_operand.vmem [shape: f32[1,128], index: 2, kind: input, shape index: {}]
  %s3 = inlined_call_operand.vmem [shape: bf16[512,128], index: 3, kind: output, shape index: {}]
  %s4 = sld [smem:[#allocation0]]
  $region30: #{residual_block_forward.2} parent=0
    _
  %s6 = ssub.s32 1, %s4
  %s7 = scalar_select 0, %s6, %s4
  // Predicated region
  $region2: #{residual_block_forward.2} parent=0 // pred_check
    _
  $region3: #{residual_block_forward.2} parent=0 // pred_check_branch
    %9 = sbr.rel (0) target = $region5
  $region4: #{residual_block_forward.2} parent=0 // pred_region
    _
  $region5: #{residual_block_forward.2} parent=0 // pred_fallthru
    _
  // Predicated region
  $region6: #{residual_block_forward.2} parent=0 // pred_check
    _
  $region7: #{residual_block_forward.2} parent=0 // pred_check_branch
    %11 = sbr.rel (0) target = $region9
  $region8: #{residual_block_forward.2} parent=0 // pred_region
    _
  $region9: #{residual_block_forward.2} parent=0 // pred_fallthru
    _
  // Predicated region
  $region10: #{residual_block_forward.2} parent=0 // pred_check
    _
  $region11: #{residual_block_forward.2} parent=0 // pred_check_branch
    %13 = sbr.rel (0) target = $region13
  $region12: #{residual_block_forward.2} parent=0 // pred_region
    _
  $region13: #{residual_block_forward.2} parent=0 // pred_fallthru
    _
  %p15 = scmp.eq.s32.totalorder 0, 0
  // Predicated region
  $region14: #{residual_block_forward.2} parent=0 // pred_check
    %p16 = pneg %p15
  $region15: #{residual_block_forward.2} parent=0 // pred_check_branch
    %18 = sbr.rel (%p16) target = $region17
  $region16: #{residual_block_forward.2} parent=0 // pred_region
    %19 = vst [vmem:[#allocation2] sm:$0xff] 0.0
    %20 = vst [vmem:[#allocation2 + $0x8] sm:$0xff] 0.0
    %21 = vst [vmem:[#allocation2 + $0x10] sm:$0xff] 0.0
    %22 = vst [vmem:[#allocation2 + $0x18] sm:$0xff] 0.0
    %23 = vst [vmem:[#allocation2 + $0x20] sm:$0xff] 0.0
    %24 = vst [vmem:[#allocation2 + $0x28] sm:$0xff] 0.0
    %25 = vst [vmem:[#allocation2 + $0x30] sm:$0xff] 0.0
    %26 = vst [vmem:[#allocation2 + $0x38] sm:$0xff] 0.0
    %27 = vst [vmem:[#allocation2 + $0x40] sm:$0xff] 0.0
    %28 = vst [vmem:[#allocation2 + $0x48] sm:$0xff] 0.0
    %29 = vst [vmem:[#allocation2 + $0x50] sm:$0xff] 0.0
    %30 = vst [vmem:[#allocation2 + $0x58] sm:$0xff] 0.0
    %31 = vst [vmem:[#allocation2 + $0x60] sm:$0xff] 0.0
    %32 = vst [vmem:[#allocation2 + $0x68] sm:$0xff] 0.0
    %33 = vst [vmem:[#allocation2 + $0x70] sm:$0xff] 0.0
    %34 = vst [vmem:[#allocation2 + $0x78] sm:$0xff] 0.0
    %35 = vst [vmem:[#allocation2 + $0x80] sm:$0xff] 0.0
    %36 = vst [vmem:[#allocation2 + $0x88] sm:$0xff] 0.0
    %37 = vst [vmem:[#allocation2 + $0x90] sm:$0xff] 0.0
    %38 = vst [vmem:[#allocation2 + $0x98] sm:$0xff] 0.0
    %39 = vst [vmem:[#allocation2 + $0xa0] sm:$0xff] 0.0
    %40 = vst [vmem:[#allocation2 + $0xa8] sm:$0xff] 0.0
    %41 = vst [vmem:[#allocation2 + $0xb0] sm:$0xff] 0.0
    %42 = vst [vmem:[#allocation2 + $0xb8] sm:$0xff] 0.0
    %43 = vst [vmem:[#allocation2 + $0xc0] sm:$0xff] 0.0
    %44 = vst [vmem:[#allocation2 + $0xc8] sm:$0xff] 0.0
    %45 = vst [vmem:[#allocation2 + $0xd0] sm:$0xff] 0.0
    %46 = vst [vmem:[#allocation2 + $0xd8] sm:$0xff] 0.0
    %47 = vst [vmem:[#allocation2 + $0xe0] sm:$0xff] 0.0
    %48 = vst [vmem:[#allocation2 + $0xe8] sm:$0xff] 0.0
    %49 = vst [vmem:[#allocation2 + $0xf0] sm:$0xff] 0.0
    %50 = vst [vmem:[#allocation2 + $0xf8] sm:$0xff] 0.0
    %51 = vst [vmem:[#allocation2 + $0x100] sm:$0xff] 0.0
    %52 = vst [vmem:[#allocation2 + $0x108] sm:$0xff] 0.0
    %53 = vst [vmem:[#allocation2 + $0x110] sm:$0xff] 0.0
    %54 = vst [vmem:[#allocation2 + $0x118] sm:$0xff] 0.0
    %55 = vst [vmem:[#allocation2 + $0x120] sm:$0xff] 0.0
    %56 = vst [vmem:[#allocation2 + $0x128] sm:$0xff] 0.0
    %57 = vst [vmem:[#allocation2 + $0x130] sm:$0xff] 0.0
    %58 = vst [vmem:[#allocation2 + $0x138] sm:$0xff] 0.0
    %59 = vst [vmem:[#allocation2 + $0x140] sm:$0xff] 0.0
    %60 = vst [vmem:[#allocation2 + $0x148] sm:$0xff] 0.0
    %61 = vst [vmem:[#allocation2 + $0x150] sm:$0xff] 0.0
    %62 = vst [vmem:[#allocation2 + $0x158] sm:$0xff] 0.0
    %63 = vst [vmem:[#allocation2 + $0x160] sm:$0xff] 0.0
    %64 = vst [vmem:[#allocation2 + $0x168] sm:$0xff] 0.0
    %65 = vst [vmem:[#allocation2 + $0x170] sm:$0xff] 0.0
    %66 = vst [vmem:[#allocation2 + $0x178] sm:$0xff] 0.0
    %67 = vst [vmem:[#allocation2 + $0x180] sm:$0xff] 0.0
    %68 = vst [vmem:[#allocation2 + $0x188] sm:$0xff] 0.0
    %69 = vst [vmem:[#allocation2 + $0x190] sm:$0xff] 0.0
    %70 = vst [vmem:[#allocation2 + $0x198] sm:$0xff] 0.0
    %71 = vst [vmem:[#allocation2 + $0x1a0] sm:$0xff] 0.0
    %72 = vst [vmem:[#allocation2 + $0x1a8] sm:$0xff] 0.0
    %73 = vst [vmem:[#allocation2 + $0x1b0] sm:$0xff] 0.0
    %74 = vst [vmem:[#allocation2 + $0x1b8] sm:$0xff] 0.0
    %75 = vst [vmem:[#allocation2 + $0x1c0] sm:$0xff] 0.0
    %76 = vst [vmem:[#allocation2 + $0x1c8] sm:$0xff] 0.0
    %77 = vst [vmem:[#allocation2 + $0x1d0] sm:$0xff] 0.0
    %78 = vst [vmem:[#allocation2 + $0x1d8] sm:$0xff] 0.0
    %79 = vst [vmem:[#allocation2 + $0x1e0] sm:$0xff] 0.0
    %80 = vst [vmem:[#allocation2 + $0x1e8] sm:$0xff] 0.0
    %81 = vst [vmem:[#allocation2 + $0x1f0] sm:$0xff] 0.0
    %82 = vst [vmem:[#allocation2 + $0x1f8] sm:$0xff] 0.0
  $region17: #{residual_block_forward.2} parent=0 // pred_fallthru
    _
  %v83 = vld [vmem:[#allocation2] sm:$0xff]
  %v84 = vld [vmem:[#allocation2 + $0x8] sm:$0xff]
  %v85 = vld [vmem:[#allocation2 + $0x10] sm:$0xff]
  %v86 = vld [vmem:[#allocation2 + $0x18] sm:$0xff]
  %v87 = vld [vmem:[#allocation2 + $0x20] sm:$0xff]
  %v88 = vld [vmem:[#allocation2 + $0x28] sm:$0xff]
  %v89 = vld [vmem:[#allocation2 + $0x30] sm:$0xff]
  %v90 = vld [vmem:[#allocation2 + $0x38] sm:$0xff]
  %v91 = vld [vmem:[#allocation2 + $0x40] sm:$0xff]
  %v92 = vld [vmem:[#allocation2 + $0x48] sm:$0xff]
  %v93 = vld [vmem:[#allocation2 + $0x50] sm:$0xff]
  %v94 = vld [vmem:[#allocation2 + $0x58] sm:$0xff]
  %v95 = vld [vmem:[#allocation2 + $0x60] sm:$0xff]
  %v96 = vld [vmem:[#allocation2 + $0x68] sm:$0xff]
  %v97 = vld [vmem:[#allocation2 + $0x70] sm:$0xff]
  %v98 = vld [vmem:[#allocation2 + $0x78] sm:$0xff]
  %v99 = vld [vmem:[#allocation2 + $0x80] sm:$0xff]
  %v100 = vld [vmem:[#allocation2 + $0x88] sm:$0xff]
  %v101 = vld [vmem:[#allocation2 + $0x90] sm:$0xff]
  %v102 = vld [vmem:[#allocation2 + $0x98] sm:$0xff]
  %v103 = vld [vmem:[#allocation2 + $0xa0] sm:$0xff]
  %v104 = vld [vmem:[#allocation2 + $0xa8] sm:$0xff]
  %v105 = vld [vmem:[#allocation2 + $0xb0] sm:$0xff]
  %v106 = vld [vmem:[#allocation2 + $0xb8] sm:$0xff]
  %v107 = vld [vmem:[#allocation2 + $0xc0] sm:$0xff]
  %v108 = vld [vmem:[#allocation2 + $0xc8] sm:$0xff]
  %v109 = vld [vmem:[#allocation2 + $0xd0] sm:$0xff]
  %v110 = vld [vmem:[#allocation2 + $0xd8] sm:$0xff]
  %v111 = vld [vmem:[#allocation2 + $0xe0] sm:$0xff]
  %v112 = vld [vmem:[#allocation2 + $0xe8] sm:$0xff]
  %v113 = vld [vmem:[#allocation2 + $0xf0] sm:$0xff]
  %v114 = vld [vmem:[#allocation2 + $0xf8] sm:$0xff]
  %v115 = vld [vmem:[#allocation2 + $0x100] sm:$0xff]
  %v116 = vld [vmem:[#allocation2 + $0x108] sm:$0xff]
  %v117 = vld [vmem:[#allocation2 + $0x110] sm:$0xff]
  %v118 = vld [vmem:[#allocation2 + $0x118] sm:$0xff]
  %v119 = vld [vmem:[#allocation2 + $0x120] sm:$0xff]
  %v120 = vld [vmem:[#allocation2 + $0x128] sm:$0xff]
  %v121 = vld [vmem:[#allocation2 + $0x130] sm:$0xff]
  %v122 = vld [vmem:[#allocation2 + $0x138] sm:$0xff]
  %v123 = vld [vmem:[#allocation2 + $0x140] sm:$0xff]
  %v124 = vld [vmem:[#allocation2 + $0x148] sm:$0xff]
  %v125 = vld [vmem:[#allocation2 + $0x150] sm:$0xff]
  %v126 = vld [vmem:[#allocation2 + $0x158] sm:$0xff]
  %v127 = vld [vmem:[#allocation2 + $0x160] sm:$0xff]
  %v128 = vld [vmem:[#allocation2 + $0x168] sm:$0xff]
  %v129 = vld [vmem:[#allocation2 + $0x170] sm:$0xff]
  %v130 = vld [vmem:[#allocation2 + $0x178] sm:$0xff]
  %v131 = vld [vmem:[#allocation2 + $0x180] sm:$0xff]
  %v132 = vld [vmem:[#allocation2 + $0x188] sm:$0xff]
  %v133 = vld [vmem:[#allocation2 + $0x190] sm:$0xff]
  %v134 = vld [vmem:[#allocation2 + $0x198] sm:$0xff]
  %v135 = vld [vmem:[#allocation2 + $0x1a0] sm:$0xff]
  %v136 = vld [vmem:[#allocation2 + $0x1a8] sm:$0xff]
  %v137 = vld [vmem:[#allocation2 + $0x1b0] sm:$0xff]
  %v138 = vld [vmem:[#allocation2 + $0x1b8] sm:$0xff]
  %v139 = vld [vmem:[#allocation2 + $0x1c0] sm:$0xff]
  %v140 = vld [vmem:[#allocation2 + $0x1c8] sm:$0xff]
  %v141 = vld [vmem:[#allocation2 + $0x1d0] sm:$0xff]
  %v142 = vld [vmem:[#allocation2 + $0x1d8] sm:$0xff]
  %v143 = vld [vmem:[#allocation2 + $0x1e0] sm:$0xff]
  %v144 = vld [vmem:[#allocation2 + $0x1e8] sm:$0xff]
  %v145 = vld [vmem:[#allocation2 + $0x1f0] sm:$0xff]
  %v146 = vld [vmem:[#allocation2 + $0x1f8] sm:$0xff]
  %v147 = vld [vmem:[%s0] sm:$0xf]
  %v148 = vld [vmem:[%s0 + $0x4] sm:$0xf]
  %v149 = vld [vmem:[%s0 + $0x8] sm:$0xf]
  %v150 = vld [vmem:[%s0 + $0xc] sm:$0xf]
  %v151 = vld [vmem:[%s0 + $0x10] sm:$0xf]
  %v152 = vld [vmem:[%s0 + $0x14] sm:$0xf]
  %v153 = vld [vmem:[%s0 + $0x18] sm:$0xf]
  %v154 = vld [vmem:[%s0 + $0x1c] sm:$0xf]
  %v155 = vld [vmem:[%s0 + $0x20] sm:$0xf]
  %v156 = vld [vmem:[%s0 + $0x24] sm:$0xf]
  %v157 = vld [vmem:[%s0 + $0x28] sm:$0xf]
  %v158 = vld [vmem:[%s0 + $0x2c] sm:$0xf]
  %v159 = vld [vmem:[%s0 + $0x30] sm:$0xf]
  %v160 = vld [vmem:[%s0 + $0x34] sm:$0xf]
  %v161 = vld [vmem:[%s0 + $0x38] sm:$0xf]
  %v162 = vld [vmem:[%s0 + $0x3c] sm:$0xf]
  %v163 = vld [vmem:[%s0 + $0x40] sm:$0xf]
  %v164 = vld [vmem:[%s0 + $0x44] sm:$0xf]
  %v165 = vld [vmem:[%s0 + $0x48] sm:$0xf]
  %v166 = vld [vmem:[%s0 + $0x4c] sm:$0xf]
  %v167 = vld [vmem:[%s0 + $0x50] sm:$0xf]
  %v168 = vld [vmem:[%s0 + $0x54] sm:$0xf]
  %v169 = vld [vmem:[%s0 + $0x58] sm:$0xf]
  %v170 = vld [vmem:[%s0 + $0x5c] sm:$0xf]
  %v171 = vld [vmem:[%s0 + $0x60] sm:$0xf]
  %v172 = vld [vmem:[%s0 + $0x64] sm:$0xf]
  %v173 = vld [vmem:[%s0 + $0x68] sm:$0xf]
  %v174 = vld [vmem:[%s0 + $0x6c] sm:$0xf]
  %v175 = vld [vmem:[%s0 + $0x70] sm:$0xf]
  %v176 = vld [vmem:[%s0 + $0x74] sm:$0xf]
  %v177 = vld [vmem:[%s0 + $0x78] sm:$0xf]
  %v178 = vld [vmem:[%s0 + $0x7c] sm:$0xf]
  %v179 = vld [vmem:[%s0 + $0x80] sm:$0xf]
  %v180 = vld [vmem:[%s0 + $0x84] sm:$0xf]
  %v181 = vld [vmem:[%s0 + $0x88] sm:$0xf]
  %v182 = vld [vmem:[%s0 + $0x8c] sm:$0xf]
  %v183 = vld [vmem:[%s0 + $0x90] sm:$0xf]
  %v184 = vld [vmem:[%s0 + $0x94] sm:$0xf]
  %v185 = vld [vmem:[%s0 + $0x98] sm:$0xf]
  %v186 = vld [vmem:[%s0 + $0x9c] sm:$0xf]
  %v187 = vld [vmem:[%s0 + $0xa0] sm:$0xf]
  %v188 = vld [vmem:[%s0 + $0xa4] sm:$0xf]
  %v189 = vld [vmem:[%s0 + $0xa8] sm:$0xf]
  %v190 = vld [vmem:[%s0 + $0xac] sm:$0xf]
  %v191 = vld [vmem:[%s0 + $0xb0] sm:$0xf]
  %v192 = vld [vmem:[%s0 + $0xb4] sm:$0xf]
  %v193 = vld [vmem:[%s0 + $0xb8] sm:$0xf]
  %v194 = vld [vmem:[%s0 + $0xbc] sm:$0xf]
  %v195 = vld [vmem:[%s0 + $0xc0] sm:$0xf]
  %v196 = vld [vmem:[%s0 + $0xc4] sm:$0xf]
  %v197 = vld [vmem:[%s0 + $0xc8] sm:$0xf]
  %v198 = vld [vmem:[%s0 + $0xcc] sm:$0xf]
  %v199 = vld [vmem:[%s0 + $0xd0] sm:$0xf]
  %v200 = vld [vmem:[%s0 + $0xd4] sm:$0xf]
  %v201 = vld [vmem:[%s0 + $0xd8] sm:$0xf]
  %v202 = vld [vmem:[%s0 + $0xdc] sm:$0xf]
  %v203 = vld [vmem:[%s0 + $0xe0] sm:$0xf]
  %v204 = vld [vmem:[%s0 + $0xe4] sm:$0xf]
  %v205 = vld [vmem:[%s0 + $0xe8] sm:$0xf]
  %v206 = vld [vmem:[%s0 + $0xec] sm:$0xf]
  %v207 = vld [vmem:[%s0 + $0xf0] sm:$0xf]
  %v208 = vld [vmem:[%s0 + $0xf4] sm:$0xf]
  %v209 = vld [vmem:[%s0 + $0xf8] sm:$0xf]
  %v210 = vld [vmem:[%s0 + $0xfc] sm:$0xf]
  %v211 = vld [vmem:[%s1] sm:$0xf]
  %v212 = vld [vmem:[%s1 + $0x4] sm:$0xf]
  %v213 = vld [vmem:[%s1 + $0x8] sm:$0xf]
  %v214 = vld [vmem:[%s1 + $0xc] sm:$0xf]
  %v215 = vld [vmem:[%s1 + $0x10] sm:$0xf]
  %v216 = vld [vmem:[%s1 + $0x14] sm:$0xf]
  %v217 = vld [vmem:[%s1 + $0x18] sm:$0xf]
  %v218 = vld [vmem:[%s1 + $0x1c] sm:$0xf]
  %v219 = vld [vmem:[%s1 + $0x20] sm:$0xf]
  %v220 = vld [vmem:[%s1 + $0x24] sm:$0xf]
  %v221 = vld [vmem:[%s1 + $0x28] sm:$0xf]
  %v222 = vld [vmem:[%s1 + $0x2c] sm:$0xf]
  %v223 = vld [vmem:[%s1 + $0x30] sm:$0xf]
  %v224 = vld [vmem:[%s1 + $0x34] sm:$0xf]
  %v225 = vld [vmem:[%s1 + $0x38] sm:$0xf]
  %v226 = vld [vmem:[%s1 + $0x3c] sm:$0xf]
  %v291 = vunpack.c.l.b16 %v147
  %v292 = vunpack.c.l.b16 %v148
  %v293 = vunpack.c.l.b16 %v149
  %v294 = vunpack.c.l.b16 %v150
  %v295 = vunpack.c.l.b16 %v151
  %v296 = vunpack.c.l.b16 %v152
  %v297 = vunpack.c.l.b16 %v153
  %v298 = vunpack.c.l.b16 %v154
  %v299 = vunpack.c.l.b16 %v155
  %v300 = vunpack.c.l.b16 %v156
  %v301 = vunpack.c.l.b16 %v157
  %v302 = vunpack.c.l.b16 %v158
  %v303 = vunpack.c.l.b16 %v159
  %v304 = vunpack.c.l.b16 %v160
  %v305 = vunpack.c.l.b16 %v161
  %v306 = vunpack.c.l.b16 %v162
  %v307 = vunpack.c.l.b16 %v163
  %v308 = vunpack.c.l.b16 %v164
  %v309 = vunpack.c.l.b16 %v165
  %v310 = vunpack.c.l.b16 %v166
  %v311 = vunpack.c.l.b16 %v167
  %v312 = vunpack.c.l.b16 %v168
  %v313 = vunpack.c.l.b16 %v169
  %v314 = vunpack.c.l.b16 %v170
  %v315 = vunpack.c.l.b16 %v171
  %v316 = vunpack.c.l.b16 %v172
  %v317 = vunpack.c.l.b16 %v173
  %v318 = vunpack.c.l.b16 %v174
  %v319 = vunpack.c.l.b16 %v175
  %v320 = vunpack.c.l.b16 %v176
  %v321 = vunpack.c.l.b16 %v177
  %v322 = vunpack.c.l.b16 %v178
  %v323 = vunpack.c.l.b16 %v179
  %v324 = vunpack.c.l.b16 %v180
  %v325 = vunpack.c.l.b16 %v181
  %v326 = vunpack.c.l.b16 %v182
  %v327 = vunpack.c.l.b16 %v183
  %v328 = vunpack.c.l.b16 %v184
  %v329 = vunpack.c.l.b16 %v185
  %v330 = vunpack.c.l.b16 %v186
  %v331 = vunpack.c.l.b16 %v187
  %v332 = vunpack.c.l.b16 %v188
  %v333 = vunpack.c.l.b16 %v189
  %v334 = vunpack.c.l.b16 %v190
  %v335 = vunpack.c.l.b16 %v191
  %v336 = vunpack.c.l.b16 %v192
  %v337 = vunpack.c.l.b16 %v193
  %v338 = vunpack.c.l.b16 %v194
  %v339 = vunpack.c.l.b16 %v195
  %v340 = vunpack.c.l.b16 %v196
  %v341 = vunpack.c.l.b16 %v197
  %v342 = vunpack.c.l.b16 %v198
  %v343 = vunpack.c.l.b16 %v199
  %v344 = vunpack.c.l.b16 %v200
  %v345 = vunpack.c.l.b16 %v201
  %v346 = vunpack.c.l.b16 %v202
  %v347 = vunpack.c.l.b16 %v203
  %v348 = vunpack.c.l.b16 %v204
  %v349 = vunpack.c.l.b16 %v205
  %v350 = vunpack.c.l.b16 %v206
  %v351 = vunpack.c.l.b16 %v207
  %v352 = vunpack.c.l.b16 %v208
  %v353 = vunpack.c.l.b16 %v209
  %v354 = vunpack.c.l.b16 %v210
  %v355 = vpack.c.b16 %v292, %v291
  %v356 = vpack.c.b16 %v294, %v293
  %v357 = vpack.c.b16 %v296, %v295
  %v358 = vpack.c.b16 %v298, %v297
  %v359 = vpack.c.b16 %v300, %v299
  %v360 = vpack.c.b16 %v302, %v301
  %v361 = vpack.c.b16 %v304, %v303
  %v362 = vpack.c.b16 %v306, %v305
  %v363 = vpack.c.b16 %v308, %v307
  %v364 = vpack.c.b16 %v310, %v309
  %v365 = vpack.c.b16 %v312, %v311
  %v366 = vpack.c.b16 %v314, %v313
  %v367 = vpack.c.b16 %v316, %v315
  %v368 = vpack.c.b16 %v318, %v317
  %v369 = vpack.c.b16 %v320, %v319
  %v370 = vpack.c.b16 %v322, %v321
  %v371 = vpack.c.b16 %v324, %v323
  %v372 = vpack.c.b16 %v326, %v325
  %v373 = vpack.c.b16 %v328, %v327
  %v374 = vpack.c.b16 %v330, %v329
  %v375 = vpack.c.b16 %v332, %v331
  %v376 = vpack.c.b16 %v334, %v333
  %v377 = vpack.c.b16 %v336, %v335
  %v378 = vpack.c.b16 %v338, %v337
  %v379 = vpack.c.b16 %v340, %v339
  %v380 = vpack.c.b16 %v342, %v341
  %v381 = vpack.c.b16 %v344, %v343
  %v382 = vpack.c.b16 %v346, %v345
  %v383 = vpack.c.b16 %v348, %v347
  %v384 = vpack.c.b16 %v350, %v349
  %v385 = vpack.c.b16 %v352, %v351
  %v386 = vpack.c.b16 %v354, %v353
  %v435 = vunpack.c.l.b16 %v211
  %v436 = vunpack.c.l.b16 %v212
  %v437 = vunpack.c.l.b16 %v213
  %v438 = vunpack.c.l.b16 %v214
  %v439 = vunpack.c.l.b16 %v215
  %v440 = vunpack.c.l.b16 %v216
  %v441 = vunpack.c.l.b16 %v217
  %v442 = vunpack.c.l.b16 %v218
  %v443 = vunpack.c.l.b16 %v219
  %v444 = vunpack.c.l.b16 %v220
  %v445 = vunpack.c.l.b16 %v221
  %v446 = vunpack.c.l.b16 %v222
  %v447 = vunpack.c.l.b16 %v223
  %v448 = vunpack.c.l.b16 %v224
  %v449 = vunpack.c.l.b16 %v225
  %v450 = vunpack.c.l.b16 %v226
  %v451 = vpack.c.b16 %v436, %v435
  %v452 = vpack.c.b16 %v438, %v437
  %v453 = vpack.c.b16 %v440, %v439
  %v454 = vpack.c.b16 %v442, %v441
  %v455 = vpack.c.b16 %v444, %v443
  %v456 = vpack.c.b16 %v446, %v445
  %v457 = vpack.c.b16 %v448, %v447
  %v458 = vpack.c.b16 %v450, %v449
  %467 = vmatprep.subr.bf16.mxu0 0
  %468 = vmatpush1.bf16.msra.mxu0 %v451
  %469 = vmatprep.subr.bf16.mxu0 0
  %470 = vmatpush1.bf16.msra.mxu0 %v452
  %471 = vmatprep.subr.bf16.mxu0 0
  %472 = vmatpush1.bf16.msra.mxu0 %v453
  %473 = vmatprep.subr.bf16.mxu0 0
  %474 = vmatpush1.bf16.msra.mxu0 %v454
  %475 = vmatprep.subr.bf16.mxu0 0
  %476 = vmatpush1.bf16.msra.mxu0 %v455
  %477 = vmatprep.subr.bf16.mxu0 0
  %478 = vmatpush1.bf16.msra.mxu0 %v456
  %479 = vmatprep.subr.bf16.mxu0 0
  %480 = vmatpush1.bf16.msra.mxu0 %v457
  %481 = vmatprep.subr.bf16.mxu0 0
  %482 = vmatpush1.bf16.msra.mxu0 %v458
  %483 = vmatprep.subr.bf16.mxu0 0
  %484 = vmatpush1.bf16.msra.mxu0 0
  %485 = vmatprep.subr.bf16.mxu0 0
  %486 = vmatpush1.bf16.msra.mxu0 0
  %487 = vmatprep.subr.bf16.mxu0 0
  %488 = vmatpush1.bf16.msra.mxu0 0
  %489 = vmatprep.subr.bf16.mxu0 0
  %490 = vmatpush1.bf16.msra.mxu0 0
  %491 = vmatprep.subr.bf16.mxu0 0
  %492 = vmatpush1.bf16.msra.mxu0 0
  %493 = vmatprep.subr.bf16.mxu0 0
  %494 = vmatpush1.bf16.msra.mxu0 0
  %495 = vmatprep.subr.bf16.mxu0 0
  %496 = vmatpush1.bf16.msra.mxu0 0
  %497 = vmatprep.subr.bf16.mxu0 0
  %498 = vmatpush1.bf16.msra.mxu0 0
  %499 = vmatprep.mubr.bf16.mxu0 0
  %500 = vmatmul.mubr.bf16.gmra.mrb[0].mxu0 %v355
  %v501 = vpop.f32.mrb[0].mxu0
  %v502 = vadd.f32 0.0, %v501
  %v503 = vpop.f32.mrb[0].mxu0
  %v504 = vpop.f32.mrb[0].mxu0
  %v505 = vadd.f32 0.0, %v504
  %v506 = vpop.f32.mrb[0].mxu0
  %507 = vmatprep.mubr.bf16.mxu0 0
  %508 = vmatmul.mubr.bf16.gmra.mrb[0].mxu0 %v356
  %v509 = vpop.f32.mrb[0].mxu0
  %v510 = vadd.f32 0.0, %v509
  %v511 = vpop.f32.mrb[0].mxu0
  %v512 = vpop.f32.mrb[0].mxu0
  %v513 = vadd.f32 0.0, %v512
  %v514 = vpop.f32.mrb[0].mxu0
  %515 = vmatprep.mubr.bf16.mxu0 0
  %516 = vmatmul.mubr.bf16.gmra.mrb[0].mxu0 %v357
  %v517 = vpop.f32.mrb[0].mxu0
  %v518 = vadd.f32 0.0, %v517
  %v519 = vpop.f32.mrb[0].mxu0
  %v520 = vpop.f32.mrb[0].mxu0
  %v521 = vadd.f32 0.0, %v520
  %v522 = vpop.f32.mrb[0].mxu0
  %523 = vmatprep.mubr.bf16.mxu0 0
  %524 = vmatmul.mubr.bf16.gmra.mrb[0].mxu0 %v358
  %v525 = vpop.f32.mrb[0].mxu0
  %v526 = vadd.f32 0.0, %v525
  %v527 = vpop.f32.mrb[0].mxu0
  %v528 = vpop.f32.mrb[0].mxu0
  %v529 = vadd.f32 0.0, %v528
  %v530 = vpop.f32.mrb[0].mxu0
  %531 = vmatprep.mubr.bf16.mxu0 0
  %532 = vmatmul.mubr.bf16.gmra.mrb[0].mxu0 %v359
  %v533 = vpop.f32.mrb[0].mxu0
  %v534 = vadd.f32 0.0, %v533
  %v535 = vpop.f32.mrb[0].mxu0
  %v536 = vpop.f32.mrb[0].mxu0
  %v537 = vadd.f32 0.0, %v536
  %v538 = vpop.f32.mrb[0].mxu0
  %539 = vmatprep.mubr.bf16.mxu0 0
  %540 = vmatmul.mubr.bf16.gmra.mrb[0].mxu0 %v360
  %v541 = vpop.f32.mrb[0].mxu0
  %v542 = vadd.f32 0.0, %v541
  %v543 = vpop.f32.mrb[0].mxu0
  %v544 = vpop.f32.mrb[0].mxu0
  %v545 = vadd.f32 0.0, %v544
  %v546 = vpop.f32.mrb[0].mxu0
  %547 = vmatprep.mubr.bf16.mxu0 0
  %548 = vmatmul.mubr.bf16.gmra.mrb[0].mxu0 %v361
  %v549 = vpop.f32.mrb[0].mxu0
  %v550 = vadd.f32 0.0, %v549
  %v551 = vpop.f32.mrb[0].mxu0
  %v552 = vpop.f32.mrb[0].mxu0
  %v553 = vadd.f32 0.0, %v552
  %v554 = vpop.f32.mrb[0].mxu0
  %555 = vmatprep.mubr.bf16.mxu0 0
  %556 = vmatmul.mubr.bf16.gmra.mrb[0].mxu0 %v362
  %v557 = vpop.f32.mrb[0].mxu0
  %v558 = vadd.f32 0.0, %v557
  %v559 = vpop.f32.mrb[0].mxu0
  %v560 = vpop.f32.mrb[0].mxu0
  %v561 = vadd.f32 0.0, %v560
  %v562 = vpop.f32.mrb[0].mxu0
  %563 = vmatprep.mubr.bf16.mxu0 0
  %564 = vmatmul.mubr.bf16.gmra.mrb[0].mxu0 %v363
  %v565 = vpop.f32.mrb[0].mxu0
  %v566 = vadd.f32 0.0, %v565
  %v567 = vpop.f32.mrb[0].mxu0
  %v568 = vpop.f32.mrb[0].mxu0
  %v569 = vadd.f32 0.0, %v568
  %v570 = vpop.f32.mrb[0].mxu0
  %571 = vmatprep.mubr.bf16.mxu0 0
  %572 = vmatmul.mubr.bf16.gmra.mrb[0].mxu0 %v364
  %v573 = vpop.f32.mrb[0].mxu0
  %v574 = vadd.f32 0.0, %v573
  %v575 = vpop.f32.mrb[0].mxu0
  %v576 = vpop.f32.mrb[0].mxu0
  %v577 = vadd.f32 0.0, %v576
  %v578 = vpop.f32.mrb[0].mxu0
  %579 = vmatprep.mubr.bf16.mxu0 0
  %580 = vmatmul.mubr.bf16.gmra.mrb[0].mxu0 %v365
  %v581 = vpop.f32.mrb[0].mxu0
  %v582 = vadd.f32 0.0, %v581
  %v583 = vpop.f32.mrb[0].mxu0
  %v584 = vpop.f32.mrb[0].mxu0
  %v585 = vadd.f32 0.0, %v584
  %v586 = vpop.f32.mrb[0].mxu0
  %587 = vmatprep.mubr.bf16.mxu0 0
  %588 = vmatmul.mubr.bf16.gmra.mrb[0].mxu0 %v366
  %v589 = vpop.f32.mrb[0].mxu0
  %v590 = vadd.f32 0.0, %v589
  %v591 = vpop.f32.mrb[0].mxu0
  %v592 = vpop.f32.mrb[0].mxu0
  %v593 = vadd.f32 0.0, %v592
  %v594 = vpop.f32.mrb[0].mxu0
  %595 = vmatprep.mubr.bf16.mxu0 0
  %596 = vmatmul.mubr.bf16.gmra.mrb[0].mxu0 %v367
  %v597 = vpop.f32.mrb[0].mxu0
  %v598 = vadd.f32 0.0, %v597
  %v599 = vpop.f32.mrb[0].mxu0
  %v600 = vpop.f32.mrb[0].mxu0
  %v601 = vadd.f32 0.0, %v600
  %v602 = vpop.f32.mrb[0].mxu0
  %603 = vmatprep.mubr.bf16.mxu0 0
  %604 = vmatmul.mubr.bf16.gmra.mrb[0].mxu0 %v368
  %v605 = vpop.f32.mrb[0].mxu0
  %v606 = vadd.f32 0.0, %v605
  %v607 = vpop.f32.mrb[0].mxu0
  %v608 = vpop.f32.mrb[0].mxu0
  %v609 = vadd.f32 0.0, %v608
  %v610 = vpop.f32.mrb[0].mxu0
  %611 = vmatprep.mubr.bf16.mxu0 0
  %612 = vmatmul.mubr.bf16.gmra.mrb[0].mxu0 %v369
  %v613 = vpop.f32.mrb[0].mxu0
  %v614 = vadd.f32 0.0, %v613
  %v615 = vpop.f32.mrb[0].mxu0
  %v616 = vpop.f32.mrb[0].mxu0
  %v617 = vadd.f32 0.0, %v616
  %v618 = vpop.f32.mrb[0].mxu0
  %619 = vmatprep.mubr.bf16.mxu0 0
  %620 = vmatmul.mubr.bf16.gmra.mrb[0].mxu0 %v370
  %v621 = vpop.f32.mrb[0].mxu0
  %v622 = vadd.f32 0.0, %v621
  %v623 = vpop.f32.mrb[0].mxu0
  %v624 = vpop.f32.mrb[0].mxu0
  %v625 = vadd.f32 0.0, %v624
  %v626 = vpop.f32.mrb[0].mxu0
  %627 = vmatprep.mubr.bf16.mxu0 0
  %628 = vmatmul.mubr.bf16.gmra.mrb[0].mxu0 %v371
  %v629 = vpop.f32.mrb[0].mxu0
  %v630 = vadd.f32 0.0, %v629
  %v631 = vpop.f32.mrb[0].mxu0
  %v632 = vpop.f32.mrb[0].mxu0
  %v633 = vadd.f32 0.0, %v632
  %v634 = vpop.f32.mrb[0].mxu0
  %635 = vmatprep.mubr.bf16.mxu0 0
  %636 = vmatmul.mubr.bf16.gmra.mrb[0].mxu0 %v372
  %v637 = vpop.f32.mrb[0].mxu0
  %v638 = vadd.f32 0.0, %v637
  %v639 = vpop.f32.mrb[0].mxu0
  %v640 = vpop.f32.mrb[0].mxu0
  %v641 = vadd.f32 0.0, %v640
  %v642 = vpop.f32.mrb[0].mxu0
  %643 = vmatprep.mubr.bf16.mxu0 0
  %644 = vmatmul.mubr.bf16.gmra.mrb[0].mxu0 %v373
  %v645 = vpop.f32.mrb[0].mxu0
  %v646 = vadd.f32 0.0, %v645
  %v647 = vpop.f32.mrb[0].mxu0
  %v648 = vpop.f32.mrb[0].mxu0
  %v649 = vadd.f32 0.0, %v648
  %v650 = vpop.f32.mrb[0].mxu0
  %651 = vmatprep.mubr.bf16.mxu0 0
  %652 = vmatmul.mubr.bf16.gmra.mrb[0].mxu0 %v374
  %v653 = vpop.f32.mrb[0].mxu0
  %v654 = vadd.f32 0.0, %v653
  %v655 = vpop.f32.mrb[0].mxu0
  %v656 = vpop.f32.mrb[0].mxu0
  %v657 = vadd.f32 0.0, %v656
  %v658 = vpop.f32.mrb[0].mxu0
  %659 = vmatprep.mubr.bf16.mxu0 0
  %660 = vmatmul.mubr.bf16.gmra.mrb[0].mxu0 %v375
  %v661 = vpop.f32.mrb[0].mxu0
  %v662 = vadd.f32 0.0, %v661
  %v663 = vpop.f32.mrb[0].mxu0
  %v664 = vpop.f32.mrb[0].mxu0
  %v665 = vadd.f32 0.0, %v664
  %v666 = vpop.f32.mrb[0].mxu0
  %667 = vmatprep.mubr.bf16.mxu0 0
  %668 = vmatmul.mubr.bf16.gmra.mrb[0].mxu0 %v376
  %v669 = vpop.f32.mrb[0].mxu0
  %v670 = vadd.f32 0.0, %v669
  %v671 = vpop.f32.mrb[0].mxu0
  %v672 = vpop.f32.mrb[0].mxu0
  %v673 = vadd.f32 0.0, %v672
  %v674 = vpop.f32.mrb[0].mxu0
  %675 = vmatprep.mubr.bf16.mxu0 0
  %676 = vmatmul.mubr.bf16.gmra.mrb[0].mxu0 %v377
  %v677 = vpop.f32.mrb[0].mxu0
  %v678 = vadd.f32 0.0, %v677
  %v679 = vpop.f32.mrb[0].mxu0
  %v680 = vpop.f32.mrb[0].mxu0
  %v681 = vadd.f32 0.0, %v680
  %v682 = vpop.f32.mrb[0].mxu0
  %683 = vmatprep.mubr.bf16.mxu0 0
  %684 = vmatmul.mubr.bf16.gmra.mrb[0].mxu0 %v378
  %v685 = vpop.f32.mrb[0].mxu0
  %v686 = vadd.f32 0.0, %v685
  %v687 = vpop.f32.mrb[0].mxu0
  %v688 = vpop.f32.mrb[0].mxu0
  %v689 = vadd.f32 0.0, %v688
  %v690 = vpop.f32.mrb[0].mxu0
  %691 = vmatprep.mubr.bf16.mxu0 0
  %692 = vmatmul.mubr.bf16.gmra.mrb[0].mxu0 %v379
  %v693 = vpop.f32.mrb[0].mxu0
  %v694 = vadd.f32 0.0, %v693
  %v695 = vpop.f32.mrb[0].mxu0
  %v696 = vpop.f32.mrb[0].mxu0
  %v697 = vadd.f32 0.0, %v696
  %v698 = vpop.f32.mrb[0].mxu0
  %699 = vmatprep.mubr.bf16.mxu0 0
  %700 = vmatmul.mubr.bf16.gmra.mrb[0].mxu0 %v380
  %v701 = vpop.f32.mrb[0].mxu0
  %v702 = vadd.f32 0.0, %v701
  %v703 = vpop.f32.mrb[0].mxu0
  %v704 = vpop.f32.mrb[0].mxu0
  %v705 = vadd.f32 0.0, %v704
  %v706 = vpop.f32.mrb[0].mxu0
  %707 = vmatprep.mubr.bf16.mxu0 0
  %708 = vmatmul.mubr.bf16.gmra.mrb[0].mxu0 %v381
  %v709 = vpop.f32.mrb[0].mxu0
  %v710 = vadd.f32 0.0, %v709
  %v711 = vpop.f32.mrb[0].mxu0
  %v712 = vpop.f32.mrb[0].mxu0
  %v713 = vadd.f32 0.0, %v712
  %v714 = vpop.f32.mrb[0].mxu0
  %715 = vmatprep.mubr.bf16.mxu0 0
  %716 = vmatmul.mubr.bf16.gmra.mrb[0].mxu0 %v382
  %v717 = vpop.f32.mrb[0].mxu0
  %v718 = vadd.f32 0.0, %v717
  %v719 = vpop.f32.mrb[0].mxu0
  %v720 = vpop.f32.mrb[0].mxu0
  %v721 = vadd.f32 0.0, %v720
  %v722 = vpop.f32.mrb[0].mxu0
  %723 = vmatprep.mubr.bf16.mxu0 0
  %724 = vmatmul.mubr.bf16.gmra.mrb[0].mxu0 %v383
  %v725 = vpop.f32.mrb[0].mxu0
  %v726 = vadd.f32 0.0, %v725
  %v727 = vpop.f32.mrb[0].mxu0
  %v728 = vpop.f32.mrb[0].mxu0
  %v729 = vadd.f32 0.0, %v728
  %v730 = vpop.f32.mrb[0].mxu0
  %731 = vmatprep.mubr.bf16.mxu0 0
  %732 = vmatmul.mubr.bf16.gmra.mrb[0].mxu0 %v384
  %v733 = vpop.f32.mrb[0].mxu0
  %v734 = vadd.f32 0.0, %v733
  %v735 = vpop.f32.mrb[0].mxu0
  %v736 = vpop.f32.mrb[0].mxu0
  %v737 = vadd.f32 0.0, %v736
  %v738 = vpop.f32.mrb[0].mxu0
  %739 = vmatprep.mubr.bf16.mxu0 0
  %740 = vmatmul.mubr.bf16.gmra.mrb[0].mxu0 %v385
  %v741 = vpop.f32.mrb[0].mxu0
  %v742 = vadd.f32 0.0, %v741
  %v743 = vpop.f32.mrb[0].mxu0
  %v744 = vpop.f32.mrb[0].mxu0
  %v745 = vadd.f32 0.0, %v744
  %v746 = vpop.f32.mrb[0].mxu0
  %747 = vmatprep.mubr.bf16.mxu0 0
  %748 = vmatmul.mubr.bf16.gmra.mrb[0].mxu0 %v386
  %v749 = vpop.f32.mrb[0].mxu0
  %v750 = vadd.f32 0.0, %v749
  %v751 = vpop.f32.mrb[0].mxu0
  %v752 = vpop.f32.mrb[0].mxu0
  %v753 = vadd.f32 0.0, %v752
  %v754 = vpop.f32.mrb[0].mxu0
  %755 = vdwg.mxu0
  %v756 = vadd.f32 %v83, %v502
  %v757 = vadd.f32 %v84, %v505
  %v758 = vadd.f32 %v85, %v510
  %v759 = vadd.f32 %v86, %v513
  %v760 = vadd.f32 %v87, %v518
  %v761 = vadd.f32 %v88, %v521
  %v762 = vadd.f32 %v89, %v526
  %v763 = vadd.f32 %v90, %v529
  %v764 = vadd.f32 %v91, %v534
  %v765 = vadd.f32 %v92, %v537
  %v766 = vadd.f32 %v93, %v542
  %v767 = vadd.f32 %v94, %v545
  %v768 = vadd.f32 %v95, %v550
  %v769 = vadd.f32 %v96, %v553
  %v770 = vadd.f32 %v97, %v558
  %v771 = vadd.f32 %v98, %v561
  %v772 = vadd.f32 %v99, %v566
  %v773 = vadd.f32 %v100, %v569
  %v774 = vadd.f32 %v101, %v574
  %v775 = vadd.f32 %v102, %v577
  %v776 = vadd.f32 %v103, %v582
  %v777 = vadd.f32 %v104, %v585
  %v778 = vadd.f32 %v105, %v590
  %v779 = vadd.f32 %v106, %v593
  %v780 = vadd.f32 %v107, %v598
  %v781 = vadd.f32 %v108, %v601
  %v782 = vadd.f32 %v109, %v606
  %v783 = vadd.f32 %v110, %v609
  %v784 = vadd.f32 %v111, %v614
  %v785 = vadd.f32 %v112, %v617
  %v786 = vadd.f32 %v113, %v622
  %v787 = vadd.f32 %v114, %v625
  %v788 = vadd.f32 %v115, %v630
  %v789 = vadd.f32 %v116, %v633
  %v790 = vadd.f32 %v117, %v638
  %v791 = vadd.f32 %v118, %v641
  %v792 = vadd.f32 %v119, %v646
  %v793 = vadd.f32 %v120, %v649
  %v794 = vadd.f32 %v121, %v654
  %v795 = vadd.f32 %v122, %v657
  %v796 = vadd.f32 %v123, %v662
  %v797 = vadd.f32 %v124, %v665
  %v798 = vadd.f32 %v125, %v670
  %v799 = vadd.f32 %v126, %v673
  %v800 = vadd.f32 %v127, %v678
  %v801 = vadd.f32 %v128, %v681
  %v802 = vadd.f32 %v129, %v686
  %v803 = vadd.f32 %v130, %v689
  %v804 = vadd.f32 %v131, %v694
  %v805 = vadd.f32 %v132, %v697
  %v806 = vadd.f32 %v133, %v702
  %v807 = vadd.f32 %v134, %v705
  %v808 = vadd.f32 %v135, %v710
  %v809 = vadd.f32 %v136, %v713
  %v810 = vadd.f32 %v137, %v718
  %v811 = vadd.f32 %v138, %v721
  %v812 = vadd.f32 %v139, %v726
  %v813 = vadd.f32 %v140, %v729
  %v814 = vadd.f32 %v141, %v734
  %v815 = vadd.f32 %v142, %v737
  %v816 = vadd.f32 %v143, %v742
  %v817 = vadd.f32 %v144, %v745
  %v818 = vadd.f32 %v145, %v750
  %v819 = vadd.f32 %v146, %v753
  %820 = vst [vmem:[#allocation2] sm:$0xff] %v756
  %821 = vst [vmem:[#allocation2 + $0x8] sm:$0xff] %v757
  %822 = vst [vmem:[#allocation2 + $0x10] sm:$0xff] %v758
  %823 = vst [vmem:[#allocation2 + $0x18] sm:$0xff] %v759
  %824 = vst [vmem:[#allocation2 + $0x20] sm:$0xff] %v760
  %825 = vst [vmem:[#allocation2 + $0x28] sm:$0xff] %v761
  %826 = vst [vmem:[#allocation2 + $0x30] sm:$0xff] %v762
  %827 = vst [vmem:[#allocation2 + $0x38] sm:$0xff] %v763
  %828 = vst [vmem:[#allocation2 + $0x40] sm:$0xff] %v764
  %829 = vst [vmem:[#allocation2 + $0x48] sm:$0xff] %v765
  %830 = vst [vmem:[#allocation2 + $0x50] sm:$0xff] %v766
  %831 = vst [vmem:[#allocation2 + $0x58] sm:$0xff] %v767
  %832 = vst [vmem:[#allocation2 + $0x60] sm:$0xff] %v768
  %833 = vst [vmem:[#allocation2 + $0x68] sm:$0xff] %v769
  %834 = vst [vmem:[#allocation2 + $0x70] sm:$0xff] %v770
  %835 = vst [vmem:[#allocation2 + $0x78] sm:$0xff] %v771
  %836 = vst [vmem:[#allocation2 + $0x80] sm:$0xff] %v772
  %837 = vst [vmem:[#allocation2 + $0x88] sm:$0xff] %v773
  %838 = vst [vmem:[#allocation2 + $0x90] sm:$0xff] %v774
  %839 = vst [vmem:[#allocation2 + $0x98] sm:$0xff] %v775
  %840 = vst [vmem:[#allocation2 + $0xa0] sm:$0xff] %v776
  %841 = vst [vmem:[#allocation2 + $0xa8] sm:$0xff] %v777
  %842 = vst [vmem:[#allocation2 + $0xb0] sm:$0xff] %v778
  %843 = vst [vmem:[#allocation2 + $0xb8] sm:$0xff] %v779
  %844 = vst [vmem:[#allocation2 + $0xc0] sm:$0xff] %v780
  %845 = vst [vmem:[#allocation2 + $0xc8] sm:$0xff] %v781
  %846 = vst [vmem:[#allocation2 + $0xd0] sm:$0xff] %v782
  %847 = vst [vmem:[#allocation2 + $0xd8] sm:$0xff] %v783
  %848 = vst [vmem:[#allocation2 + $0xe0] sm:$0xff] %v784
  %849 = vst [vmem:[#allocation2 + $0xe8] sm:$0xff] %v785
  %850 = vst [vmem:[#allocation2 + $0xf0] sm:$0xff] %v786
  %851 = vst [vmem:[#allocation2 + $0xf8] sm:$0xff] %v787
  %852 = vst [vmem:[#allocation2 + $0x100] sm:$0xff] %v788
  %853 = vst [vmem:[#allocation2 + $0x108] sm:$0xff] %v789
  %854 = vst [vmem:[#allocation2 + $0x110] sm:$0xff] %v790
  %855 = vst [vmem:[#allocation2 + $0x118] sm:$0xff] %v791
  %856 = vst [vmem:[#allocation2 + $0x120] sm:$0xff] %v792
  %857 = vst [vmem:[#allocation2 + $0x128] sm:$0xff] %v793
  %858 = vst [vmem:[#allocation2 + $0x130] sm:$0xff] %v794
  %859 = vst [vmem:[#allocation2 + $0x138] sm:$0xff] %v795
  %860 = vst [vmem:[#allocation2 + $0x140] sm:$0xff] %v796
  %861 = vst [vmem:[#allocation2 + $0x148] sm:$0xff] %v797
  %862 = vst [vmem:[#allocation2 + $0x150] sm:$0xff] %v798
  %863 = vst [vmem:[#allocation2 + $0x158] sm:$0xff] %v799
  %864 = vst [vmem:[#allocation2 + $0x160] sm:$0xff] %v800
  %865 = vst [vmem:[#allocation2 + $0x168] sm:$0xff] %v801
  %866 = vst [vmem:[#allocation2 + $0x170] sm:$0xff] %v802
  %867 = vst [vmem:[#allocation2 + $0x178] sm:$0xff] %v803
  %868 = vst [vmem:[#allocation2 + $0x180] sm:$0xff] %v804
  %869 = vst [vmem:[#allocation2 + $0x188] sm:$0xff] %v805
  %870 = vst [vmem:[#allocation2 + $0x190] sm:$0xff] %v806
  %871 = vst [vmem:[#allocation2 + $0x198] sm:$0xff] %v807
  %872 = vst [vmem:[#allocation2 + $0x1a0] sm:$0xff] %v808
  %873 = vst [vmem:[#allocation2 + $0x1a8] sm:$0xff] %v809
  %874 = vst [vmem:[#allocation2 + $0x1b0] sm:$0xff] %v810
  %875 = vst [vmem:[#allocation2 + $0x1b8] sm:$0xff] %v811
  %876 = vst [vmem:[#allocation2 + $0x1c0] sm:$0xff] %v812
  %877 = vst [vmem:[#allocation2 + $0x1c8] sm:$0xff] %v813
  %878 = vst [vmem:[#allocation2 + $0x1d0] sm:$0xff] %v814
  %879 = vst [vmem:[#allocation2 + $0x1d8] sm:$0xff] %v815
  %880 = vst [vmem:[#allocation2 + $0x1e0] sm:$0xff] %v816
  %881 = vst [vmem:[#allocation2 + $0x1e8] sm:$0xff] %v817
  %882 = vst [vmem:[#allocation2 + $0x1f0] sm:$0xff] %v818
  %883 = vst [vmem:[#allocation2 + $0x1f8] sm:$0xff] %v819
  // Predicated region
  $region18: #{residual_block_forward.2} parent=0 // pred_check
    %p884 = pneg %p15
  $region19: #{residual_block_forward.2} parent=0 // pred_check_branch
    %886 = sbr.rel (%p884) target = $region21
  $region20: #{residual_block_forward.2} parent=0 // pred_region
    %v887 = vld [vmem:[#allocation2] sm:$0xff]
    %v888 = vld [vmem:[#allocation2 + $0x8] sm:$0xff]
    %v889 = vld [vmem:[#allocation2 + $0x10] sm:$0xff]
    %v890 = vld [vmem:[#allocation2 + $0x18] sm:$0xff]
    %v891 = vld [vmem:[#allocation2 + $0x20] sm:$0xff]
    %v892 = vld [vmem:[#allocation2 + $0x28] sm:$0xff]
    %v893 = vld [vmem:[#allocation2 + $0x30] sm:$0xff]
    %v894 = vld [vmem:[#allocation2 + $0x38] sm:$0xff]
    %v895 = vld [vmem:[#allocation2 + $0x40] sm:$0xff]
    %v896 = vld [vmem:[#allocation2 + $0x48] sm:$0xff]
    %v897 = vld [vmem:[#allocation2 + $0x50] sm:$0xff]
    %v898 = vld [vmem:[#allocation2 + $0x58] sm:$0xff]
    %v899 = vld [vmem:[#allocation2 + $0x60] sm:$0xff]
    %v900 = vld [vmem:[#allocation2 + $0x68] sm:$0xff]
    %v901 = vld [vmem:[#allocation2 + $0x70] sm:$0xff]
    %v902 = vld [vmem:[#allocation2 + $0x78] sm:$0xff]
    %v903 = vld [vmem:[#allocation2 + $0x80] sm:$0xff]
    %v904 = vld [vmem:[#allocation2 + $0x88] sm:$0xff]
    %v905 = vld [vmem:[#allocation2 + $0x90] sm:$0xff]
    %v906 = vld [vmem:[#allocation2 + $0x98] sm:$0xff]
    %v907 = vld [vmem:[#allocation2 + $0xa0] sm:$0xff]
    %v908 = vld [vmem:[#allocation2 + $0xa8] sm:$0xff]
    %v909 = vld [vmem:[#allocation2 + $0xb0] sm:$0xff]
    %v910 = vld [vmem:[#allocation2 + $0xb8] sm:$0xff]
    %v911 = vld [vmem:[#allocation2 + $0xc0] sm:$0xff]
    %v912 = vld [vmem:[#allocation2 + $0xc8] sm:$0xff]
    %v913 = vld [vmem:[#allocation2 + $0xd0] sm:$0xff]
    %v914 = vld [vmem:[#allocation2 + $0xd8] sm:$0xff]
    %v915 = vld [vmem:[#allocation2 + $0xe0] sm:$0xff]
    %v916 = vld [vmem:[#allocation2 + $0xe8] sm:$0xff]
    %v917 = vld [vmem:[#allocation2 + $0xf0] sm:$0xff]
    %v918 = vld [vmem:[#allocation2 + $0xf8] sm:$0xff]
    %v919 = vld [vmem:[#allocation2 + $0x100] sm:$0xff]
    %v920 = vld [vmem:[#allocation2 + $0x108] sm:$0xff]
    %v921 = vld [vmem:[#allocation2 + $0x110] sm:$0xff]
    %v922 = vld [vmem:[#allocation2 + $0x118] sm:$0xff]
    %v923 = vld [vmem:[#allocation2 + $0x120] sm:$0xff]
    %v924 = vld [vmem:[#allocation2 + $0x128] sm:$0xff]
    %v925 = vld [vmem:[#allocation2 + $0x130] sm:$0xff]
    %v926 = vld [vmem:[#allocation2 + $0x138] sm:$0xff]
    %v927 = vld [vmem:[#allocation2 + $0x140] sm:$0xff]
    %v928 = vld [vmem:[#allocation2 + $0x148] sm:$0xff]
    %v929 = vld [vmem:[#allocation2 + $0x150] sm:$0xff]
    %v930 = vld [vmem:[#allocation2 + $0x158] sm:$0xff]
    %v931 = vld [vmem:[#allocation2 + $0x160] sm:$0xff]
    %v932 = vld [vmem:[#allocation2 + $0x168] sm:$0xff]
    %v933 = vld [vmem:[#allocation2 + $0x170] sm:$0xff]
    %v934 = vld [vmem:[#allocation2 + $0x178] sm:$0xff]
    %v935 = vld [vmem:[#allocation2 + $0x180] sm:$0xff]
    %v936 = vld [vmem:[#allocation2 + $0x188] sm:$0xff]
    %v937 = vld [vmem:[#allocation2 + $0x190] sm:$0xff]
    %v938 = vld [vmem:[#allocation2 + $0x198] sm:$0xff]
    %v939 = vld [vmem:[#allocation2 + $0x1a0] sm:$0xff]
    %v940 = vld [vmem:[#allocation2 + $0x1a8] sm:$0xff]
    %v941 = vld [vmem:[#allocation2 + $0x1b0] sm:$0xff]
    %v942 = vld [vmem:[#allocation2 + $0x1b8] sm:$0xff]
    %v943 = vld [vmem:[#allocation2 + $0x1c0] sm:$0xff]
    %v944 = vld [vmem:[#allocation2 + $0x1c8] sm:$0xff]
    %v945 = vld [vmem:[#allocation2 + $0x1d0] sm:$0xff]
    %v946 = vld [vmem:[#allocation2 + $0x1d8] sm:$0xff]
    %v947 = vld [vmem:[#allocation2 + $0x1e0] sm:$0xff]
    %v948 = vld [vmem:[#allocation2 + $0x1e8] sm:$0xff]
    %v949 = vld [vmem:[#allocation2 + $0x1f0] sm:$0xff]
    %v950 = vld [vmem:[#allocation2 + $0x1f8] sm:$0xff]
    %v951 = vld [vmem:[%s2] sm:$0x1]
    %v953 = vlaneseq
    %v954 = vshrl.u32 %v953, 7
    %v955 = vsub.s32 0, %v954
    %v956 = vrot.slane %v951, %v955
    %v958 = vadd.f32 %v887, %v956
    %v959 = vadd.f32 %v888, %v956
    %v960 = vadd.f32 %v889, %v956
    %v961 = vadd.f32 %v890, %v956
    %v962 = vadd.f32 %v891, %v956
    %v963 = vadd.f32 %v892, %v956
    %v964 = vadd.f32 %v893, %v956
    %v965 = vadd.f32 %v894, %v956
    %v966 = vadd.f32 %v895, %v956
    %v967 = vadd.f32 %v896, %v956
    %v968 = vadd.f32 %v897, %v956
    %v969 = vadd.f32 %v898, %v956
    %v970 = vadd.f32 %v899, %v956
    %v971 = vadd.f32 %v900, %v956
    %v972 = vadd.f32 %v901, %v956
    %v973 = vadd.f32 %v902, %v956
    %v974 = vadd.f32 %v903, %v956
    %v975 = vadd.f32 %v904, %v956
    %v976 = vadd.f32 %v905, %v956
    %v977 = vadd.f32 %v906, %v956
    %v978 = vadd.f32 %v907, %v956
    %v979 = vadd.f32 %v908, %v956
    %v980 = vadd.f32 %v909, %v956
    %v981 = vadd.f32 %v910, %v956
    %v982 = vadd.f32 %v911, %v956
    %v983 = vadd.f32 %v912, %v956
    %v984 = vadd.f32 %v913, %v956
    %v985 = vadd.f32 %v914, %v956
    %v986 = vadd.f32 %v915, %v956
    %v987 = vadd.f32 %v916, %v956
    %v988 = vadd.f32 %v917, %v956
    %v989 = vadd.f32 %v918, %v956
    %v990 = vadd.f32 %v919, %v956
    %v991 = vadd.f32 %v920, %v956
    %v992 = vadd.f32 %v921, %v956
    %v993 = vadd.f32 %v922, %v956
    %v994 = vadd.f32 %v923, %v956
    %v995 = vadd.f32 %v924, %v956
    %v996 = vadd.f32 %v925, %v956
    %v997 = vadd.f32 %v926, %v956
    %v998 = vadd.f32 %v927, %v956
    %v999 = vadd.f32 %v928, %v956
    %v1000 = vadd.f32 %v929, %v956
    %v1001 = vadd.f32 %v930, %v956
    %v1002 = vadd.f32 %v931, %v956
    %v1003 = vadd.f32 %v932, %v956
    %v1004 = vadd.f32 %v933, %v956
    %v1005 = vadd.f32 %v934, %v956
    %v1006 = vadd.f32 %v935, %v956
    %v1007 = vadd.f32 %v936, %v956
    %v1008 = vadd.f32 %v937, %v956
    %v1009 = vadd.f32 %v938, %v956
    %v1010 = vadd.f32 %v939, %v956
    %v1011 = vadd.f32 %v940, %v956
    %v1012 = vadd.f32 %v941, %v956
    %v1013 = vadd.f32 %v942, %v956
    %v1014 = vadd.f32 %v943, %v956
    %v1015 = vadd.f32 %v944, %v956
    %v1016 = vadd.f32 %v945, %v956
    %v1017 = vadd.f32 %v946, %v956
    %v1018 = vadd.f32 %v947, %v956
    %v1019 = vadd.f32 %v948, %v956
    %v1020 = vadd.f32 %v949, %v956
    %v1021 = vadd.f32 %v950, %v956
    %v1022 = vmax.f32 %v958, 0.0
    %v1023 = vmax.f32 %v959, 0.0
    %v1024 = vmax.f32 %v960, 0.0
    %v1025 = vmax.f32 %v961, 0.0
    %v1026 = vmax.f32 %v962, 0.0
    %v1027 = vmax.f32 %v963, 0.0
    %v1028 = vmax.f32 %v964, 0.0
    %v1029 = vmax.f32 %v965, 0.0
    %v1030 = vmax.f32 %v966, 0.0
    %v1031 = vmax.f32 %v967, 0.0
    %v1032 = vmax.f32 %v968, 0.0
    %v1033 = vmax.f32 %v969, 0.0
    %v1034 = vmax.f32 %v970, 0.0
    %v1035 = vmax.f32 %v971, 0.0
    %v1036 = vmax.f32 %v972, 0.0
    %v1037 = vmax.f32 %v973, 0.0
    %v1038 = vmax.f32 %v974, 0.0
    %v1039 = vmax.f32 %v975, 0.0
    %v1040 = vmax.f32 %v976, 0.0
    %v1041 = vmax.f32 %v977, 0.0
    %v1042 = vmax.f32 %v978, 0.0
    %v1043 = vmax.f32 %v979, 0.0
    %v1044 = vmax.f32 %v980, 0.0
    %v1045 = vmax.f32 %v981, 0.0
    %v1046 = vmax.f32 %v982, 0.0
    %v1047 = vmax.f32 %v983, 0.0
    %v1048 = vmax.f32 %v984, 0.0
    %v1049 = vmax.f32 %v985, 0.0
    %v1050 = vmax.f32 %v986, 0.0
    %v1051 = vmax.f32 %v987, 0.0
    %v1052 = vmax.f32 %v988, 0.0
    %v1053 = vmax.f32 %v989, 0.0
    %v1054 = vmax.f32 %v990, 0.0
    %v1055 = vmax.f32 %v991, 0.0
    %v1056 = vmax.f32 %v992, 0.0
    %v1057 = vmax.f32 %v993, 0.0
    %v1058 = vmax.f32 %v994, 0.0
    %v1059 = vmax.f32 %v995, 0.0
    %v1060 = vmax.f32 %v996, 0.0
    %v1061 = vmax.f32 %v997, 0.0
    %v1062 = vmax.f32 %v998, 0.0
    %v1063 = vmax.f32 %v999, 0.0
    %v1064 = vmax.f32 %v1000, 0.0
    %v1065 = vmax.f32 %v1001, 0.0
    %v1066 = vmax.f32 %v1002, 0.0
    %v1067 = vmax.f32 %v1003, 0.0
    %v1068 = vmax.f32 %v1004, 0.0
    %v1069 = vmax.f32 %v1005, 0.0
    %v1070 = vmax.f32 %v1006, 0.0
    %v1071 = vmax.f32 %v1007, 0.0
    %v1072 = vmax.f32 %v1008, 0.0
    %v1073 = vmax.f32 %v1009, 0.0
    %v1074 = vmax.f32 %v1010, 0.0
    %v1075 = vmax.f32 %v1011, 0.0
    %v1076 = vmax.f32 %v1012, 0.0
    %v1077 = vmax.f32 %v1013, 0.0
    %v1078 = vmax.f32 %v1014, 0.0
    %v1079 = vmax.f32 %v1015, 0.0
    %v1080 = vmax.f32 %v1016, 0.0
    %v1081 = vmax.f32 %v1017, 0.0
    %v1082 = vmax.f32 %v1018, 0.0
    %v1083 = vmax.f32 %v1019, 0.0
    %v1084 = vmax.f32 %v1020, 0.0
    %v1085 = vmax.f32 %v1021, 0.0
    %v1086 = vpack.c.bf16 %v1023, %v1022
    %v1087 = vpack.c.bf16 %v1025, %v1024
    %v1088 = vpack.c.bf16 %v1027, %v1026
    %v1089 = vpack.c.bf16 %v1029, %v1028
    %v1090 = vpack.c.bf16 %v1031, %v1030
    %v1091 = vpack.c.bf16 %v1033, %v1032
    %v1092 = vpack.c.bf16 %v1035, %v1034
    %v1093 = vpack.c.bf16 %v1037, %v1036
    %v1094 = vpack.c.bf16 %v1039, %v1038
    %v1095 = vpack.c.bf16 %v1041, %v1040
    %v1096 = vpack.c.bf16 %v1043, %v1042
    %v1097 = vpack.c.bf16 %v1045, %v1044
    %v1098 = vpack.c.bf16 %v1047, %v1046
    %v1099 = vpack.c.bf16 %v1049, %v1048
    %v1100 = vpack.c.bf16 %v1051, %v1050
    %v1101 = vpack.c.bf16 %v1053, %v1052
    %v1102 = vpack.c.bf16 %v1055, %v1054
    %v1103 = vpack.c.bf16 %v1057, %v1056
    %v1104 = vpack.c.bf16 %v1059, %v1058
    %v1105 = vpack.c.bf16 %v1061, %v1060
    %v1106 = vpack.c.bf16 %v1063, %v1062
    %v1107 = vpack.c.bf16 %v1065, %v1064
    %v1108 = vpack.c.bf16 %v1067, %v1066
    %v1109 = vpack.c.bf16 %v1069, %v1068
    %v1110 = vpack.c.bf16 %v1071, %v1070
    %v1111 = vpack.c.bf16 %v1073, %v1072
    %v1112 = vpack.c.bf16 %v1075, %v1074
    %v1113 = vpack.c.bf16 %v1077, %v1076
    %v1114 = vpack.c.bf16 %v1079, %v1078
    %v1115 = vpack.c.bf16 %v1081, %v1080
    %v1116 = vpack.c.bf16 %v1083, %v1082
    %v1117 = vpack.c.bf16 %v1085, %v1084
    %v1150 = vunpack.c.l.b16 %v1086
    %v1151 = vunpack.c.h.b16 %v1086
    %v1152 = vunpack.c.l.b16 %v1087
    %v1153 = vunpack.c.h.b16 %v1087
    %v1154 = vunpack.c.l.b16 %v1088
    %v1155 = vunpack.c.h.b16 %v1088
    %v1156 = vunpack.c.l.b16 %v1089
    %v1157 = vunpack.c.h.b16 %v1089
    %v1158 = vunpack.c.l.b16 %v1090
    %v1159 = vunpack.c.h.b16 %v1090
    %v1160 = vunpack.c.l.b16 %v1091
    %v1161 = vunpack.c.h.b16 %v1091
    %v1162 = vunpack.c.l.b16 %v1092
    %v1163 = vunpack.c.h.b16 %v1092
    %v1164 = vunpack.c.l.b16 %v1093
    %v1165 = vunpack.c.h.b16 %v1093
    %v1166 = vunpack.c.l.b16 %v1094
    %v1167 = vunpack.c.h.b16 %v1094
    %v1168 = vunpack.c.l.b16 %v1095
    %v1169 = vunpack.c.h.b16 %v1095
    %v1170 = vunpack.c.l.b16 %v1096
    %v1171 = vunpack.c.h.b16 %v1096
    %v1172 = vunpack.c.l.b16 %v1097
    %v1173 = vunpack.c.h.b16 %v1097
    %v1174 = vunpack.c.l.b16 %v1098
    %v1175 = vunpack.c.h.b16 %v1098
    %v1176 = vunpack.c.l.b16 %v1099
    %v1177 = vunpack.c.h.b16 %v1099
    %v1178 = vunpack.c.l.b16 %v1100
    %v1179 = vunpack.c.h.b16 %v1100
    %v1180 = vunpack.c.l.b16 %v1101
    %v1181 = vunpack.c.h.b16 %v1101
    %v1182 = vunpack.c.l.b16 %v1102
    %v1183 = vunpack.c.h.b16 %v1102
    %v1184 = vunpack.c.l.b16 %v1103
    %v1185 = vunpack.c.h.b16 %v1103
    %v1186 = vunpack.c.l.b16 %v1104
    %v1187 = vunpack.c.h.b16 %v1104
    %v1188 = vunpack.c.l.b16 %v1105
    %v1189 = vunpack.c.h.b16 %v1105
    %v1190 = vunpack.c.l.b16 %v1106
    %v1191 = vunpack.c.h.b16 %v1106
    %v1192 = vunpack.c.l.b16 %v1107
    %v1193 = vunpack.c.h.b16 %v1107
    %v1194 = vunpack.c.l.b16 %v1108
    %v1195 = vunpack.c.h.b16 %v1108
    %v1196 = vunpack.c.l.b16 %v1109
    %v1197 = vunpack.c.h.b16 %v1109
    %v1198 = vunpack.c.l.b16 %v1110
    %v1199 = vunpack.c.h.b16 %v1110
    %v1200 = vunpack.c.l.b16 %v1111
    %v1201 = vunpack.c.h.b16 %v1111
    %v1202 = vunpack.c.l.b16 %v1112
    %v1203 = vunpack.c.h.b16 %v1112
    %v1204 = vunpack.c.l.b16 %v1113
    %v1205 = vunpack.c.h.b16 %v1113
    %v1206 = vunpack.c.l.b16 %v1114
    %v1207 = vunpack.c.h.b16 %v1114
    %v1208 = vunpack.c.l.b16 %v1115
    %v1209 = vunpack.c.h.b16 %v1115
    %v1210 = vunpack.c.l.b16 %v1116
    %v1211 = vunpack.c.h.b16 %v1116
    %v1212 = vunpack.c.l.b16 %v1117
    %v1213 = vunpack.c.h.b16 %v1117
    %v1214 = vpack.c.b16 %v1150, %v1150
    %v1215 = vpack.c.b16 %v1151, %v1151
    %v1216 = vpack.c.b16 %v1152, %v1152
    %v1217 = vpack.c.b16 %v1153, %v1153
    %v1218 = vpack.c.b16 %v1154, %v1154
    %v1219 = vpack.c.b16 %v1155, %v1155
    %v1220 = vpack.c.b16 %v1156, %v1156
    %v1221 = vpack.c.b16 %v1157, %v1157
    %v1222 = vpack.c.b16 %v1158, %v1158
    %v1223 = vpack.c.b16 %v1159, %v1159
    %v1224 = vpack.c.b16 %v1160, %v1160
    %v1225 = vpack.c.b16 %v1161, %v1161
    %v1226 = vpack.c.b16 %v1162, %v1162
    %v1227 = vpack.c.b16 %v1163, %v1163
    %v1228 = vpack.c.b16 %v1164, %v1164
    %v1229 = vpack.c.b16 %v1165, %v1165
    %v1230 = vpack.c.b16 %v1166, %v1166
    %v1231 = vpack.c.b16 %v1167, %v1167
    %v1232 = vpack.c.b16 %v1168, %v1168
    %v1233 = vpack.c.b16 %v1169, %v1169
    %v1234 = vpack.c.b16 %v1170, %v1170
    %v1235 = vpack.c.b16 %v1171, %v1171
    %v1236 = vpack.c.b16 %v1172, %v1172
    %v1237 = vpack.c.b16 %v1173, %v1173
    %v1238 = vpack.c.b16 %v1174, %v1174
    %v1239 = vpack.c.b16 %v1175, %v1175
    %v1240 = vpack.c.b16 %v1176, %v1176
    %v1241 = vpack.c.b16 %v1177, %v1177
    %v1242 = vpack.c.b16 %v1178, %v1178
    %v1243 = vpack.c.b16 %v1179, %v1179
    %v1244 = vpack.c.b16 %v1180, %v1180
    %v1245 = vpack.c.b16 %v1181, %v1181
    %v1246 = vpack.c.b16 %v1182, %v1182
    %v1247 = vpack.c.b16 %v1183, %v1183
    %v1248 = vpack.c.b16 %v1184, %v1184
    %v1249 = vpack.c.b16 %v1185, %v1185
    %v1250 = vpack.c.b16 %v1186, %v1186
    %v1251 = vpack.c.b16 %v1187, %v1187
    %v1252 = vpack.c.b16 %v1188, %v1188
    %v1253 = vpack.c.b16 %v1189, %v1189
    %v1254 = vpack.c.b16 %v1190, %v1190
    %v1255 = vpack.c.b16 %v1191, %v1191
    %v1256 = vpack.c.b16 %v1192, %v1192
    %v1257 = vpack.c.b16 %v1193, %v1193
    %v1258 = vpack.c.b16 %v1194, %v1194
    %v1259 = vpack.c.b16 %v1195, %v1195
    %v1260 = vpack.c.b16 %v1196, %v1196
    %v1261 = vpack.c.b16 %v1197, %v1197
    %v1262 = vpack.c.b16 %v1198, %v1198
    %v1263 = vpack.c.b16 %v1199, %v1199
    %v1264 = vpack.c.b16 %v1200, %v1200
    %v1265 = vpack.c.b16 %v1201, %v1201
    %v1266 = vpack.c.b16 %v1202, %v1202
    %v1267 = vpack.c.b16 %v1203, %v1203
    %v1268 = vpack.c.b16 %v1204, %v1204
    %v1269 = vpack.c.b16 %v1205, %v1205
    %v1270 = vpack.c.b16 %v1206, %v1206
    %v1271 = vpack.c.b16 %v1207, %v1207
    %v1272 = vpack.c.b16 %v1208, %v1208
    %v1273 = vpack.c.b16 %v1209, %v1209
    %v1274 = vpack.c.b16 %v1210, %v1210
    %v1275 = vpack.c.b16 %v1211, %v1211
    %v1276 = vpack.c.b16 %v1212, %v1212
    %v1277 = vpack.c.b16 %v1213, %v1213
    %1342 = vst [vmem:[%s3] sm:$0xf] %v1214
    %1343 = vst [vmem:[%s3 + $0x4] sm:$0xf] %v1215
    %1344 = vst [vmem:[%s3 + $0x8] sm:$0xf] %v1216
    %1345 = vst [vmem:[%s3 + $0xc] sm:$0xf] %v1217
    %1346 = vst [vmem:[%s3 + $0x10] sm:$0xf] %v1218
    %1347 = vst [vmem:[%s3 + $0x14] sm:$0xf] %v1219
    %1348 = vst [vmem:[%s3 + $0x18] sm:$0xf] %v1220
    %1349 = vst [vmem:[%s3 + $0x1c] sm:$0xf] %v1221
    %1350 = vst [vmem:[%s3 + $0x20] sm:$0xf] %v1222
    %1351 = vst [vmem:[%s3 + $0x24] sm:$0xf] %v1223
    %1352 = vst [vmem:[%s3 + $0x28] sm:$0xf] %v1224
    %1353 = vst [vmem:[%s3 + $0x2c] sm:$0xf] %v1225
    %1354 = vst [vmem:[%s3 + $0x30] sm:$0xf] %v1226
    %1355 = vst [vmem:[%s3 + $0x34] sm:$0xf] %v1227
    %1356 = vst [vmem:[%s3 + $0x38] sm:$0xf] %v1228
    %1357 = vst [vmem:[%s3 + $0x3c] sm:$0xf] %v1229
    %1358 = vst [vmem:[%s3 + $0x40] sm:$0xf] %v1230
    %1359 = vst [vmem:[%s3 + $0x44] sm:$0xf] %v1231
    %1360 = vst [vmem:[%s3 + $0x48] sm:$0xf] %v1232
    %1361 = vst [vmem:[%s3 + $0x4c] sm:$0xf] %v1233
    %1362 = vst [vmem:[%s3 + $0x50] sm:$0xf] %v1234
    %1363 = vst [vmem:[%s3 + $0x54] sm:$0xf] %v1235
    %1364 = vst [vmem:[%s3 + $0x58] sm:$0xf] %v1236
    %1365 = vst [vmem:[%s3 + $0x5c] sm:$0xf] %v1237
    %1366 = vst [vmem:[%s3 + $0x60] sm:$0xf] %v1238
    %1367 = vst [vmem:[%s3 + $0x64] sm:$0xf] %v1239
    %1368 = vst [vmem:[%s3 + $0x68] sm:$0xf] %v1240
    %1369 = vst [vmem:[%s3 + $0x6c] sm:$0xf] %v1241
    %1370 = vst [vmem:[%s3 + $0x70] sm:$0xf] %v1242
    %1371 = vst [vmem:[%s3 + $0x74] sm:$0xf] %v1243
    %1372 = vst [vmem:[%s3 + $0x78] sm:$0xf] %v1244
    %1373 = vst [vmem:[%s3 + $0x7c] sm:$0xf] %v1245
    %1374 = vst [vmem:[%s3 + $0x80] sm:$0xf] %v1246
    %1375 = vst [vmem:[%s3 + $0x84] sm:$0xf] %v1247
    %1376 = vst [vmem:[%s3 + $0x88] sm:$0xf] %v1248
    %1377 = vst [vmem:[%s3 + $0x8c] sm:$0xf] %v1249
    %1378 = vst [vmem:[%s3 + $0x90] sm:$0xf] %v1250
    %1379 = vst [vmem:[%s3 + $0x94] sm:$0xf] %v1251
    %1380 = vst [vmem:[%s3 + $0x98] sm:$0xf] %v1252
    %1381 = vst [vmem:[%s3 + $0x9c] sm:$0xf] %v1253
    %1382 = vst [vmem:[%s3 + $0xa0] sm:$0xf] %v1254
    %1383 = vst [vmem:[%s3 + $0xa4] sm:$0xf] %v1255
    %1384 = vst [vmem:[%s3 + $0xa8] sm:$0xf] %v1256
    %1385 = vst [vmem:[%s3 + $0xac] sm:$0xf] %v1257
    %1386 = vst [vmem:[%s3 + $0xb0] sm:$0xf] %v1258
    %1387 = vst [vmem:[%s3 + $0xb4] sm:$0xf] %v1259
    %1388 = vst [vmem:[%s3 + $0xb8] sm:$0xf] %v1260
    %1389 = vst [vmem:[%s3 + $0xbc] sm:$0xf] %v1261
    %1390 = vst [vmem:[%s3 + $0xc0] sm:$0xf] %v1262
    %1391 = vst [vmem:[%s3 + $0xc4] sm:$0xf] %v1263
    %1392 = vst [vmem:[%s3 + $0xc8] sm:$0xf] %v1264
    %1393 = vst [vmem:[%s3 + $0xcc] sm:$0xf] %v1265
    %1394 = vst [vmem:[%s3 + $0xd0] sm:$0xf] %v1266
    %1395 = vst [vmem:[%s3 + $0xd4] sm:$0xf] %v1267
    %1396 = vst [vmem:[%s3 + $0xd8] sm:$0xf] %v1268
    %1397 = vst [vmem:[%s3 + $0xdc] sm:$0xf] %v1269
    %1398 = vst [vmem:[%s3 + $0xe0] sm:$0xf] %v1270
    %1399 = vst [vmem:[%s3 + $0xe4] sm:$0xf] %v1271
    %1400 = vst [vmem:[%s3 + $0xe8] sm:$0xf] %v1272
    %1401 = vst [vmem:[%s3 + $0xec] sm:$0xf] %v1273
    %1402 = vst [vmem:[%s3 + $0xf0] sm:$0xf] %v1274
    %1403 = vst [vmem:[%s3 + $0xf4] sm:$0xf] %v1275
    %1404 = vst [vmem:[%s3 + $0xf8] sm:$0xf] %v1276
    %1405 = vst [vmem:[%s3 + $0xfc] sm:$0xf] %v1277
  $region21: #{residual_block_forward.2} parent=0 // pred_fallthru
    _
  // Predicated region
  $region22: #{residual_block_forward.2} parent=0 // pred_check
    _
  $region23: #{residual_block_forward.2} parent=0 // pred_check_branch
    %1407 = sbr.rel (0) target = $region25
  $region24: #{residual_block_forward.2} parent=0 // pred_region
    _
  $region25: #{residual_block_forward.2} parent=0 // pred_fallthru
    _
  // Predicated region
  $region26: #{residual_block_forward.2} parent=0 // pred_check
    _
  $region27: #{residual_block_forward.2} parent=0 // pred_check_branch
    %1409 = sbr.rel (0) target = $region29
  $region28: #{residual_block_forward.2} parent=0 // pred_region
    _
  $region29: #{residual_block_forward.2} parent=0 // pred_fallthru
    _

// kernel: residual_block_forward.3
$region0: #{residual_block_forward.3}
  #allocation0 [shape = 'u32[]', space=smem, size = 0x4, offset = 0x4, fixed_abs, tag = 'smem constant byte address 0x4 - core index']
  #allocation1 [shape = 'u32[144,128]{1,0:T(1,128)}', space=vmem, size = 0x12000, scoped, tag = 'internal scratch']
  #allocation2 [shape = 'f32[512,128]{1,0:T(8,128)}', space=vmem, size = 0x40000, scoped, tag = 'scratch operand']
  %s0 = inlined_call_operand.vmem [shape: bf16[512,128], index: 0, kind: input, shape index: {}]
  %s1 = inlined_call_operand.vmem [shape: bf16[128,128], index: 1, kind: input, shape index: {}]
  %s2 = inlined_call_operand.vmem [shape: f32[1,128], index: 2, kind: input, shape index: {}]
  %s3 = inlined_call_operand.vmem [shape: bf16[512,128], index: 3, kind: input, shape index: {}]
  %s4 = inlined_call_operand.vmem [shape: f32[512,128], index: 4, kind: output, shape index: {}]
  %s5 = sld [smem:[#allocation0]]
  $region34: #{residual_block_forward.3} parent=0
    _
  %s7 = ssub.s32 1, %s5
  %s8 = scalar_select 0, %s7, %s5
  // Predicated region
  $region2: #{residual_block_forward.3} parent=0 // pred_check
    _
  $region3: #{residual_block_forward.3} parent=0 // pred_check_branch
    %10 = sbr.rel (0) target = $region5
  $region4: #{residual_block_forward.3} parent=0 // pred_region
    _
  $region5: #{residual_block_forward.3} parent=0 // pred_fallthru
    _
  // Predicated region
  $region6: #{residual_block_forward.3} parent=0 // pred_check
    _
  $region7: #{residual_block_forward.3} parent=0 // pred_check_branch
    %12 = sbr.rel (0) target = $region9
  $region8: #{residual_block_forward.3} parent=0 // pred_region
    _
  $region9: #{residual_block_forward.3} parent=0 // pred_fallthru
    _
  // Predicated region
  $region10: #{residual_block_forward.3} parent=0 // pred_check
    _
  $region11: #{residual_block_forward.3} parent=0 // pred_check_branch
    %14 = sbr.rel (0) target = $region13
  $region12: #{residual_block_forward.3} parent=0 // pred_region
    _
  $region13: #{residual_block_forward.3} parent=0 // pred_fallthru
    _
  // Predicated region
  $region14: #{residual_block_forward.3} parent=0 // pred_check
    _
  $region15: #{residual_block_forward.3} parent=0 // pred_check_branch
    %16 = sbr.rel (0) target = $region17
  $region16: #{residual_block_forward.3} parent=0 // pred_region
    _
  $region17: #{residual_block_forward.3} parent=0 // pred_fallthru
    _
  %p18 = scmp.eq.s32.totalorder 0, 0
  // Predicated region
  $region18: #{residual_block_forward.3} parent=0 // pred_check
    %p19 = pneg %p18
  $region19: #{residual_block_forward.3} parent=0 // pred_check_branch
    %21 = sbr.rel (%p19) target = $region21
  $region20: #{residual_block_forward.3} parent=0 // pred_region
    %22 = vst [vmem:[#allocation2] sm:$0xff] 0.0
    %23 = vst [vmem:[#allocation2 + $0x8] sm:$0xff] 0.0
    %24 = vst [vmem:[#allocation2 + $0x10] sm:$0xff] 0.0
    %25 = vst [vmem:[#allocation2 + $0x18] sm:$0xff] 0.0
    %26 = vst [vmem:[#allocation2 + $0x20] sm:$0xff] 0.0
    %27 = vst [vmem:[#allocation2 + $0x28] sm:$0xff] 0.0
    %28 = vst [vmem:[#allocation2 + $0x30] sm:$0xff] 0.0
    %29 = vst [vmem:[#allocation2 + $0x38] sm:$0xff] 0.0
    %30 = vst [vmem:[#allocation2 + $0x40] sm:$0xff] 0.0
    %31 = vst [vmem:[#allocation2 + $0x48] sm:$0xff] 0.0
    %32 = vst [vmem:[#allocation2 + $0x50] sm:$0xff] 0.0
    %33 = vst [vmem:[#allocation2 + $0x58] sm:$0xff] 0.0
    %34 = vst [vmem:[#allocation2 + $0x60] sm:$0xff] 0.0
    %35 = vst [vmem:[#allocation2 + $0x68] sm:$0xff] 0.0
    %36 = vst [vmem:[#allocation2 + $0x70] sm:$0xff] 0.0
    %37 = vst [vmem:[#allocation2 + $0x78] sm:$0xff] 0.0
    %38 = vst [vmem:[#allocation2 + $0x80] sm:$0xff] 0.0
    %39 = vst [vmem:[#allocation2 + $0x88] sm:$0xff] 0.0
    %40 = vst [vmem:[#allocation2 + $0x90] sm:$0xff] 0.0
    %41 = vst [vmem:[#allocation2 + $0x98] sm:$0xff] 0.0
    %42 = vst [vmem:[#allocation2 + $0xa0] sm:$0xff] 0.0
    %43 = vst [vmem:[#allocation2 + $0xa8] sm:$0xff] 0.0
    %44 = vst [vmem:[#allocation2 + $0xb0] sm:$0xff] 0.0
    %45 = vst [vmem:[#allocation2 + $0xb8] sm:$0xff] 0.0
    %46 = vst [vmem:[#allocation2 + $0xc0] sm:$0xff] 0.0
    %47 = vst [vmem:[#allocation2 + $0xc8] sm:$0xff] 0.0
    %48 = vst [vmem:[#allocation2 + $0xd0] sm:$0xff] 0.0
    %49 = vst [vmem:[#allocation2 + $0xd8] sm:$0xff] 0.0
    %50 = vst [vmem:[#allocation2 + $0xe0] sm:$0xff] 0.0
    %51 = vst [vmem:[#allocation2 + $0xe8] sm:$0xff] 0.0
    %52 = vst [vmem:[#allocation2 + $0xf0] sm:$0xff] 0.0
    %53 = vst [vmem:[#allocation2 + $0xf8] sm:$0xff] 0.0
    %54 = vst [vmem:[#allocation2 + $0x100] sm:$0xff] 0.0
    %55 = vst [vmem:[#allocation2 + $0x108] sm:$0xff] 0.0
    %56 = vst [vmem:[#allocation2 + $0x110] sm:$0xff] 0.0
    %57 = vst [vmem:[#allocation2 + $0x118] sm:$0xff] 0.0
    %58 = vst [vmem:[#allocation2 + $0x120] sm:$0xff] 0.0
    %59 = vst [vmem:[#allocation2 + $0x128] sm:$0xff] 0.0
    %60 = vst [vmem:[#allocation2 + $0x130] sm:$0xff] 0.0
    %61 = vst [vmem:[#allocation2 + $0x138] sm:$0xff] 0.0
    %62 = vst [vmem:[#allocation2 + $0x140] sm:$0xff] 0.0
    %63 = vst [vmem:[#allocation2 + $0x148] sm:$0xff] 0.0
    %64 = vst [vmem:[#allocation2 + $0x150] sm:$0xff] 0.0
    %65 = vst [vmem:[#allocation2 + $0x158] sm:$0xff] 0.0
    %66 = vst [vmem:[#allocation2 + $0x160] sm:$0xff] 0.0
    %67 = vst [vmem:[#allocation2 + $0x168] sm:$0xff] 0.0
    %68 = vst [vmem:[#allocation2 + $0x170] sm:$0xff] 0.0
    %69 = vst [vmem:[#allocation2 + $0x178] sm:$0xff] 0.0
    %70 = vst [vmem:[#allocation2 + $0x180] sm:$0xff] 0.0
    %71 = vst [vmem:[#allocation2 + $0x188] sm:$0xff] 0.0
    %72 = vst [vmem:[#allocation2 + $0x190] sm:$0xff] 0.0
    %73 = vst [vmem:[#allocation2 + $0x198] sm:$0xff] 0.0
    %74 = vst [vmem:[#allocation2 + $0x1a0] sm:$0xff] 0.0
    %75 = vst [vmem:[#allocation2 + $0x1a8] sm:$0xff] 0.0
    %76 = vst [vmem:[#allocation2 + $0x1b0] sm:$0xff] 0.0
    %77 = vst [vmem:[#allocation2 + $0x1b8] sm:$0xff] 0.0
    %78 = vst [vmem:[#allocation2 + $0x1c0] sm:$0xff] 0.0
    %79 = vst [vmem:[#allocation2 + $0x1c8] sm:$0xff] 0.0
    %80 = vst [vmem:[#allocation2 + $0x1d0] sm:$0xff] 0.0
    %81 = vst [vmem:[#allocation2 + $0x1d8] sm:$0xff] 0.0
    %82 = vst [vmem:[#allocation2 + $0x1e0] sm:$0xff] 0.0
    %83 = vst [vmem:[#allocation2 + $0x1e8] sm:$0xff] 0.0
    %84 = vst [vmem:[#allocation2 + $0x1f0] sm:$0xff] 0.0
    %85 = vst [vmem:[#allocation2 + $0x1f8] sm:$0xff] 0.0
  $region21: #{residual_block_forward.3} parent=0 // pred_fallthru
    _
  %v86 = vld [vmem:[#allocation2] sm:$0xff]
  %v87 = vld [vmem:[#allocation2 + $0x8] sm:$0xff]
  %v88 = vld [vmem:[#allocation2 + $0x10] sm:$0xff]
  %v89 = vld [vmem:[#allocation2 + $0x18] sm:$0xff]
  %v90 = vld [vmem:[#allocation2 + $0x20] sm:$0xff]
  %v91 = vld [vmem:[#allocation2 + $0x28] sm:$0xff]
  %v92 = vld [vmem:[#allocation2 + $0x30] sm:$0xff]
  %v93 = vld [vmem:[#allocation2 + $0x38] sm:$0xff]
  %v94 = vld [vmem:[#allocation2 + $0x40] sm:$0xff]
  %v95 = vld [vmem:[#allocation2 + $0x48] sm:$0xff]
  %v96 = vld [vmem:[#allocation2 + $0x50] sm:$0xff]
  %v97 = vld [vmem:[#allocation2 + $0x58] sm:$0xff]
  %v98 = vld [vmem:[#allocation2 + $0x60] sm:$0xff]
  %v99 = vld [vmem:[#allocation2 + $0x68] sm:$0xff]
  %v100 = vld [vmem:[#allocation2 + $0x70] sm:$0xff]
  %v101 = vld [vmem:[#allocation2 + $0x78] sm:$0xff]
  %v102 = vld [vmem:[#allocation2 + $0x80] sm:$0xff]
  %v103 = vld [vmem:[#allocation2 + $0x88] sm:$0xff]
  %v104 = vld [vmem:[#allocation2 + $0x90] sm:$0xff]
  %v105 = vld [vmem:[#allocation2 + $0x98] sm:$0xff]
  %v106 = vld [vmem:[#allocation2 + $0xa0] sm:$0xff]
  %v107 = vld [vmem:[#allocation2 + $0xa8] sm:$0xff]
  %v108 = vld [vmem:[#allocation2 + $0xb0] sm:$0xff]
  %v109 = vld [vmem:[#allocation2 + $0xb8] sm:$0xff]
  %v110 = vld [vmem:[#allocation2 + $0xc0] sm:$0xff]
  %v111 = vld [vmem:[#allocation2 + $0xc8] sm:$0xff]
  %v112 = vld [vmem:[#allocation2 + $0xd0] sm:$0xff]
  %v113 = vld [vmem:[#allocation2 + $0xd8] sm:$0xff]
  %v114 = vld [vmem:[#allocation2 + $0xe0] sm:$0xff]
  %v115 = vld [vmem:[#allocation2 + $0xe8] sm:$0xff]
  %v116 = vld [vmem:[#allocation2 + $0xf0] sm:$0xff]
  %v117 = vld [vmem:[#allocation2 + $0xf8] sm:$0xff]
  %v118 = vld [vmem:[#allocation2 + $0x100] sm:$0xff]
  %v119 = vld [vmem:[#allocation2 + $0x108] sm:$0xff]
  %v120 = vld [vmem:[#allocation2 + $0x110] sm:$0xff]
  %v121 = vld [vmem:[#allocation2 + $0x118] sm:$0xff]
  %v122 = vld [vmem:[#allocation2 + $0x120] sm:$0xff]
  %v123 = vld [vmem:[#allocation2 + $0x128] sm:$0xff]
  %v124 = vld [vmem:[#allocation2 + $0x130] sm:$0xff]
  %v125 = vld [vmem:[#allocation2 + $0x138] sm:$0xff]
  %v126 = vld [vmem:[#allocation2 + $0x140] sm:$0xff]
  %v127 = vld [vmem:[#allocation2 + $0x148] sm:$0xff]
  %v128 = vld [vmem:[#allocation2 + $0x150] sm:$0xff]
  %v129 = vld [vmem:[#allocation2 + $0x158] sm:$0xff]
  %v130 = vld [vmem:[#allocation2 + $0x160] sm:$0xff]
  %v131 = vld [vmem:[#allocation2 + $0x168] sm:$0xff]
  %v132 = vld [vmem:[#allocation2 + $0x170] sm:$0xff]
  %v133 = vld [vmem:[#allocation2 + $0x178] sm:$0xff]
  %v134 = vld [vmem:[#allocation2 + $0x180] sm:$0xff]
  %v135 = vld [vmem:[#allocation2 + $0x188] sm:$0xff]
  %v136 = vld [vmem:[#allocation2 + $0x190] sm:$0xff]
  %v137 = vld [vmem:[#allocation2 + $0x198] sm:$0xff]
  %v138 = vld [vmem:[#allocation2 + $0x1a0] sm:$0xff]
  %v139 = vld [vmem:[#allocation2 + $0x1a8] sm:$0xff]
  %v140 = vld [vmem:[#allocation2 + $0x1b0] sm:$0xff]
  %v141 = vld [vmem:[#allocation2 + $0x1b8] sm:$0xff]
  %v142 = vld [vmem:[#allocation2 + $0x1c0] sm:$0xff]
  %v143 = vld [vmem:[#allocation2 + $0x1c8] sm:$0xff]
  %v144 = vld [vmem:[#allocation2 + $0x1d0] sm:$0xff]
  %v145 = vld [vmem:[#allocation2 + $0x1d8] sm:$0xff]
  %v146 = vld [vmem:[#allocation2 + $0x1e0] sm:$0xff]
  %v147 = vld [vmem:[#allocation2 + $0x1e8] sm:$0xff]
  %v148 = vld [vmem:[#allocation2 + $0x1f0] sm:$0xff]
  %v149 = vld [vmem:[#allocation2 + $0x1f8] sm:$0xff]
  %v150 = vld [vmem:[%s0] sm:$0xf]
  %v151 = vld [vmem:[%s0 + $0x4] sm:$0xf]
  %v152 = vld [vmem:[%s0 + $0x8] sm:$0xf]
  %v153 = vld [vmem:[%s0 + $0xc] sm:$0xf]
  %v154 = vld [vmem:[%s0 + $0x10] sm:$0xf]
  %v155 = vld [vmem:[%s0 + $0x14] sm:$0xf]
  %v156 = vld [vmem:[%s0 + $0x18] sm:$0xf]
  %v157 = vld [vmem:[%s0 + $0x1c] sm:$0xf]
  %v158 = vld [vmem:[%s0 + $0x20] sm:$0xf]
  %v159 = vld [vmem:[%s0 + $0x24] sm:$0xf]
  %v160 = vld [vmem:[%s0 + $0x28] sm:$0xf]
  %v161 = vld [vmem:[%s0 + $0x2c] sm:$0xf]
  %v162 = vld [vmem:[%s0 + $0x30] sm:$0xf]
  %v163 = vld [vmem:[%s0 + $0x34] sm:$0xf]
  %v164 = vld [vmem:[%s0 + $0x38] sm:$0xf]
  %v165 = vld [vmem:[%s0 + $0x3c] sm:$0xf]
  %v166 = vld [vmem:[%s0 + $0x40] sm:$0xf]
  %v167 = vld [vmem:[%s0 + $0x44] sm:$0xf]
  %v168 = vld [vmem:[%s0 + $0x48] sm:$0xf]
  %v169 = vld [vmem:[%s0 + $0x4c] sm:$0xf]
  %v170 = vld [vmem:[%s0 + $0x50] sm:$0xf]
  %v171 = vld [vmem:[%s0 + $0x54] sm:$0xf]
  %v172 = vld [vmem:[%s0 + $0x58] sm:$0xf]
  %v173 = vld [vmem:[%s0 + $0x5c] sm:$0xf]
  %v174 = vld [vmem:[%s0 + $0x60] sm:$0xf]
  %v175 = vld [vmem:[%s0 + $0x64] sm:$0xf]
  %v176 = vld [vmem:[%s0 + $0x68] sm:$0xf]
  %v177 = vld [vmem:[%s0 + $0x6c] sm:$0xf]
  %v178 = vld [vmem:[%s0 + $0x70] sm:$0xf]
  %v179 = vld [vmem:[%s0 + $0x74] sm:$0xf]
  %v180 = vld [vmem:[%s0 + $0x78] sm:$0xf]
  %v181 = vld [vmem:[%s0 + $0x7c] sm:$0xf]
  %v182 = vld [vmem:[%s0 + $0x80] sm:$0xf]
  %v183 = vld [vmem:[%s0 + $0x84] sm:$0xf]
  %v184 = vld [vmem:[%s0 + $0x88] sm:$0xf]
  %v185 = vld [vmem:[%s0 + $0x8c] sm:$0xf]
  %v186 = vld [vmem:[%s0 + $0x90] sm:$0xf]
  %v187 = vld [vmem:[%s0 + $0x94] sm:$0xf]
  %v188 = vld [vmem:[%s0 + $0x98] sm:$0xf]
  %v189 = vld [vmem:[%s0 + $0x9c] sm:$0xf]
  %v190 = vld [vmem:[%s0 + $0xa0] sm:$0xf]
  %v191 = vld [vmem:[%s0 + $0xa4] sm:$0xf]
  %v192 = vld [vmem:[%s0 + $0xa8] sm:$0xf]
  %v193 = vld [vmem:[%s0 + $0xac] sm:$0xf]
  %v194 = vld [vmem:[%s0 + $0xb0] sm:$0xf]
  %v195 = vld [vmem:[%s0 + $0xb4] sm:$0xf]
  %v196 = vld [vmem:[%s0 + $0xb8] sm:$0xf]
  %v197 = vld [vmem:[%s0 + $0xbc] sm:$0xf]
  %v198 = vld [vmem:[%s0 + $0xc0] sm:$0xf]
  %v199 = vld [vmem:[%s0 + $0xc4] sm:$0xf]
  %v200 = vld [vmem:[%s0 + $0xc8] sm:$0xf]
  %v201 = vld [vmem:[%s0 + $0xcc] sm:$0xf]
  %v202 = vld [vmem:[%s0 + $0xd0] sm:$0xf]
  %v203 = vld [vmem:[%s0 + $0xd4] sm:$0xf]
  %v204 = vld [vmem:[%s0 + $0xd8] sm:$0xf]
  %v205 = vld [vmem:[%s0 + $0xdc] sm:$0xf]
  %v206 = vld [vmem:[%s0 + $0xe0] sm:$0xf]
  %v207 = vld [vmem:[%s0 + $0xe4] sm:$0xf]
  %v208 = vld [vmem:[%s0 + $0xe8] sm:$0xf]
  %v209 = vld [vmem:[%s0 + $0xec] sm:$0xf]
  %v210 = vld [vmem:[%s0 + $0xf0] sm:$0xf]
  %v211 = vld [vmem:[%s0 + $0xf4] sm:$0xf]
  %v212 = vld [vmem:[%s0 + $0xf8] sm:$0xf]
  %v213 = vld [vmem:[%s0 + $0xfc] sm:$0xf]
  %v214 = vld [vmem:[%s1] sm:$0xf]
  %v215 = vld [vmem:[%s1 + $0x4] sm:$0xf]
  %v216 = vld [vmem:[%s1 + $0x8] sm:$0xf]
  %v217 = vld [vmem:[%s1 + $0xc] sm:$0xf]
  %v218 = vld [vmem:[%s1 + $0x10] sm:$0xf]
  %v219 = vld [vmem:[%s1 + $0x14] sm:$0xf]
  %v220 = vld [vmem:[%s1 + $0x18] sm:$0xf]
  %v221 = vld [vmem:[%s1 + $0x1c] sm:$0xf]
  %v222 = vld [vmem:[%s1 + $0x20] sm:$0xf]
  %v223 = vld [vmem:[%s1 + $0x24] sm:$0xf]
  %v224 = vld [vmem:[%s1 + $0x28] sm:$0xf]
  %v225 = vld [vmem:[%s1 + $0x2c] sm:$0xf]
  %v226 = vld [vmem:[%s1 + $0x30] sm:$0xf]
  %v227 = vld [vmem:[%s1 + $0x34] sm:$0xf]
  %v228 = vld [vmem:[%s1 + $0x38] sm:$0xf]
  %v229 = vld [vmem:[%s1 + $0x3c] sm:$0xf]
  %v294 = vunpack.c.l.b16 %v150
  %v295 = vunpack.c.l.b16 %v151
  %v296 = vunpack.c.l.b16 %v152
  %v297 = vunpack.c.l.b16 %v153
  %v298 = vunpack.c.l.b16 %v154
  %v299 = vunpack.c.l.b16 %v155
  %v300 = vunpack.c.l.b16 %v156
  %v301 = vunpack.c.l.b16 %v157
  %v302 = vunpack.c.l.b16 %v158
  %v303 = vunpack.c.l.b16 %v159
  %v304 = vunpack.c.l.b16 %v160
  %v305 = vunpack.c.l.b16 %v161
  %v306 = vunpack.c.l.b16 %v162
  %v307 = vunpack.c.l.b16 %v163
  %v308 = vunpack.c.l.b16 %v164
  %v309 = vunpack.c.l.b16 %v165
  %v310 = vunpack.c.l.b16 %v166
  %v311 = vunpack.c.l.b16 %v167
  %v312 = vunpack.c.l.b16 %v168
  %v313 = vunpack.c.l.b16 %v169
  %v314 = vunpack.c.l.b16 %v170
  %v315 = vunpack.c.l.b16 %v171
  %v316 = vunpack.c.l.b16 %v172
  %v317 = vunpack.c.l.b16 %v173
  %v318 = vunpack.c.l.b16 %v174
  %v319 = vunpack.c.l.b16 %v175
  %v320 = vunpack.c.l.b16 %v176
  %v321 = vunpack.c.l.b16 %v177
  %v322 = vunpack.c.l.b16 %v178
  %v323 = vunpack.c.l.b16 %v179
  %v324 = vunpack.c.l.b16 %v180
  %v325 = vunpack.c.l.b16 %v181
  %v326 = vunpack.c.l.b16 %v182
  %v327 = vunpack.c.l.b16 %v183
  %v328 = vunpack.c.l.b16 %v184
  %v329 = vunpack.c.l.b16 %v185
  %v330 = vunpack.c.l.b16 %v186
  %v331 = vunpack.c.l.b16 %v187
  %v332 = vunpack.c.l.b16 %v188
  %v333 = vunpack.c.l.b16 %v189
  %v334 = vunpack.c.l.b16 %v190
  %v335 = vunpack.c.l.b16 %v191
  %v336 = vunpack.c.l.b16 %v192
  %v337 = vunpack.c.l.b16 %v193
  %v338 = vunpack.c.l.b16 %v194
  %v339 = vunpack.c.l.b16 %v195
  %v340 = vunpack.c.l.b16 %v196
  %v341 = vunpack.c.l.b16 %v197
  %v342 = vunpack.c.l.b16 %v198
  %v343 = vunpack.c.l.b16 %v199
  %v344 = vunpack.c.l.b16 %v200
  %v345 = vunpack.c.l.b16 %v201
  %v346 = vunpack.c.l.b16 %v202
  %v347 = vunpack.c.l.b16 %v203
  %v348 = vunpack.c.l.b16 %v204
  %v349 = vunpack.c.l.b16 %v205
  %v350 = vunpack.c.l.b16 %v206
  %v351 = vunpack.c.l.b16 %v207
  %v352 = vunpack.c.l.b16 %v208
  %v353 = vunpack.c.l.b16 %v209
  %v354 = vunpack.c.l.b16 %v210
  %v355 = vunpack.c.l.b16 %v211
  %v356 = vunpack.c.l.b16 %v212
  %v357 = vunpack.c.l.b16 %v213
  %v358 = vpack.c.b16 %v295, %v294
  %v359 = vpack.c.b16 %v297, %v296
  %v360 = vpack.c.b16 %v299, %v298
  %v361 = vpack.c.b16 %v301, %v300
  %v362 = vpack.c.b16 %v303, %v302
  %v363 = vpack.c.b16 %v305, %v304
  %v364 = vpack.c.b16 %v307, %v306
  %v365 = vpack.c.b16 %v309, %v308
  %v366 = vpack.c.b16 %v311, %v310
  %v367 = vpack.c.b16 %v313, %v312
  %v368 = vpack.c.b16 %v315, %v314
  %v369 = vpack.c.b16 %v317, %v316
  %v370 = vpack.c.b16 %v319, %v318
  %v371 = vpack.c.b16 %v321, %v320
  %v372 = vpack.c.b16 %v323, %v322
  %v373 = vpack.c.b16 %v325, %v324
  %v374 = vpack.c.b16 %v327, %v326
  %v375 = vpack.c.b16 %v329, %v328
  %v376 = vpack.c.b16 %v331, %v330
  %v377 = vpack.c.b16 %v333, %v332
  %v378 = vpack.c.b16 %v335, %v334
  %v379 = vpack.c.b16 %v337, %v336
  %v380 = vpack.c.b16 %v339, %v338
  %v381 = vpack.c.b16 %v341, %v340
  %v382 = vpack.c.b16 %v343, %v342
  %v383 = vpack.c.b16 %v345, %v344
  %v384 = vpack.c.b16 %v347, %v346
  %v385 = vpack.c.b16 %v349, %v348
  %v386 = vpack.c.b16 %v351, %v350
  %v387 = vpack.c.b16 %v353, %v352
  %v388 = vpack.c.b16 %v355, %v354
  %v389 = vpack.c.b16 %v357, %v356
  %v438 = vunpack.c.l.b16 %v214
  %v439 = vunpack.c.l.b16 %v215
  %v440 = vunpack.c.l.b16 %v216
  %v441 = vunpack.c.l.b16 %v217
  %v442 = vunpack.c.l.b16 %v218
  %v443 = vunpack.c.l.b16 %v219
  %v444 = vunpack.c.l.b16 %v220
  %v445 = vunpack.c.l.b16 %v221
  %v446 = vunpack.c.l.b16 %v222
  %v447 = vunpack.c.l.b16 %v223
  %v448 = vunpack.c.l.b16 %v224
  %v449 = vunpack.c.l.b16 %v225
  %v450 = vunpack.c.l.b16 %v226
  %v451 = vunpack.c.l.b16 %v227
  %v452 = vunpack.c.l.b16 %v228
  %v453 = vunpack.c.l.b16 %v229
  %v454 = vpack.c.b16 %v439, %v438
  %v455 = vpack.c.b16 %v441, %v440
  %v456 = vpack.c.b16 %v443, %v442
  %v457 = vpack.c.b16 %v445, %v444
  %v458 = vpack.c.b16 %v447, %v446
  %v459 = vpack.c.b16 %v449, %v448
  %v460 = vpack.c.b16 %v451, %v450
  %v461 = vpack.c.b16 %v453, %v452
  %470 = vmatprep.subr.bf16.mxu0 0
  %471 = vmatpush1.bf16.msra.mxu0 %v454
  %472 = vmatprep.subr.bf16.mxu0 0
  %473 = vmatpush1.bf16.msra.mxu0 %v455
  %474 = vmatprep.subr.bf16.mxu0 0
  %475 = vmatpush1.bf16.msra.mxu0 %v456
  %476 = vmatprep.subr.bf16.mxu0 0
  %477 = vmatpush1.bf16.msra.mxu0 %v457
  %478 = vmatprep.subr.bf16.mxu0 0
  %479 = vmatpush1.bf16.msra.mxu0 %v458
  %480 = vmatprep.subr.bf16.mxu0 0
  %481 = vmatpush1.bf16.msra.mxu0 %v459
  %482 = vmatprep.subr.bf16.mxu0 0
  %483 = vmatpush1.bf16.msra.mxu0 %v460
  %484 = vmatprep.subr.bf16.mxu0 0
  %485 = vmatpush1.bf16.msra.mxu0 %v461
  %486 = vmatprep.subr.bf16.mxu0 0
  %487 = vmatpush1.bf16.msra.mxu0 0
  %488 = vmatprep.subr.bf16.mxu0 0
  %489 = vmatpush1.bf16.msra.mxu0 0
  %490 = vmatprep.subr.bf16.mxu0 0
  %491 = vmatpush1.bf16.msra.mxu0 0
  %492 = vmatprep.subr.bf16.mxu0 0
  %493 = vmatpush1.bf16.msra.mxu0 0
  %494 = vmatprep.subr.bf16.mxu0 0
  %495 = vmatpush1.bf16.msra.mxu0 0
  %496 = vmatprep.subr.bf16.mxu0 0
  %497 = vmatpush1.bf16.msra.mxu0 0
  %498 = vmatprep.subr.bf16.mxu0 0
  %499 = vmatpush1.bf16.msra.mxu0 0
  %500 = vmatprep.subr.bf16.mxu0 0
  %501 = vmatpush1.bf16.msra.mxu0 0
  %502 = vmatprep.mubr.bf16.mxu0 0
  %503 = vmatmul.mubr.bf16.gmra.mrb[0].mxu0 %v358
  %v504 = vpop.f32.mrb[0].mxu0
  %v505 = vadd.f32 0.0, %v504
  %v506 = vpop.f32.mrb[0].mxu0
  %v507 = vpop.f32.mrb[0].mxu0
  %v508 = vadd.f32 0.0, %v507
  %v509 = vpop.f32.mrb[0].mxu0
  %510 = vmatprep.mubr.bf16.mxu0 0
  %511 = vmatmul.mubr.bf16.gmra.mrb[0].mxu0 %v359
  %v512 = vpop.f32.mrb[0].mxu0
  %v513 = vadd.f32 0.0, %v512
  %v514 = vpop.f32.mrb[0].mxu0
  %v515 = vpop.f32.mrb[0].mxu0
  %v516 = vadd.f32 0.0, %v515
  %v517 = vpop.f32.mrb[0].mxu0
  %518 = vmatprep.mubr.bf16.mxu0 0
  %519 = vmatmul.mubr.bf16.gmra.mrb[0].mxu0 %v360
  %v520 = vpop.f32.mrb[0].mxu0
  %v521 = vadd.f32 0.0, %v520
  %v522 = vpop.f32.mrb[0].mxu0
  %v523 = vpop.f32.mrb[0].mxu0
  %v524 = vadd.f32 0.0, %v523
  %v525 = vpop.f32.mrb[0].mxu0
  %526 = vmatprep.mubr.bf16.mxu0 0
  %527 = vmatmul.mubr.bf16.gmra.mrb[0].mxu0 %v361
  %v528 = vpop.f32.mrb[0].mxu0
  %v529 = vadd.f32 0.0, %v528
  %v530 = vpop.f32.mrb[0].mxu0
  %v531 = vpop.f32.mrb[0].mxu0
  %v532 = vadd.f32 0.0, %v531
  %v533 = vpop.f32.mrb[0].mxu0
  %534 = vmatprep.mubr.bf16.mxu0 0
  %535 = vmatmul.mubr.bf16.gmra.mrb[0].mxu0 %v362
  %v536 = vpop.f32.mrb[0].mxu0
  %v537 = vadd.f32 0.0, %v536
  %v538 = vpop.f32.mrb[0].mxu0
  %v539 = vpop.f32.mrb[0].mxu0
  %v540 = vadd.f32 0.0, %v539
  %v541 = vpop.f32.mrb[0].mxu0
  %542 = vmatprep.mubr.bf16.mxu0 0
  %543 = vmatmul.mubr.bf16.gmra.mrb[0].mxu0 %v363
  %v544 = vpop.f32.mrb[0].mxu0
  %v545 = vadd.f32 0.0, %v544
  %v546 = vpop.f32.mrb[0].mxu0
  %v547 = vpop.f32.mrb[0].mxu0
  %v548 = vadd.f32 0.0, %v547
  %v549 = vpop.f32.mrb[0].mxu0
  %550 = vmatprep.mubr.bf16.mxu0 0
  %551 = vmatmul.mubr.bf16.gmra.mrb[0].mxu0 %v364
  %v552 = vpop.f32.mrb[0].mxu0
  %v553 = vadd.f32 0.0, %v552
  %v554 = vpop.f32.mrb[0].mxu0
  %v555 = vpop.f32.mrb[0].mxu0
  %v556 = vadd.f32 0.0, %v555
  %v557 = vpop.f32.mrb[0].mxu0
  %558 = vmatprep.mubr.bf16.mxu0 0
  %559 = vmatmul.mubr.bf16.gmra.mrb[0].mxu0 %v365
  %v560 = vpop.f32.mrb[0].mxu0
  %v561 = vadd.f32 0.0, %v560
  %v562 = vpop.f32.mrb[0].mxu0
  %v563 = vpop.f32.mrb[0].mxu0
  %v564 = vadd.f32 0.0, %v563
  %v565 = vpop.f32.mrb[0].mxu0
  %566 = vmatprep.mubr.bf16.mxu0 0
  %567 = vmatmul.mubr.bf16.gmra.mrb[0].mxu0 %v366
  %v568 = vpop.f32.mrb[0].mxu0
  %v569 = vadd.f32 0.0, %v568
  %v570 = vpop.f32.mrb[0].mxu0
  %v571 = vpop.f32.mrb[0].mxu0
  %v572 = vadd.f32 0.0, %v571
  %v573 = vpop.f32.mrb[0].mxu0
  %574 = vmatprep.mubr.bf16.mxu0 0
  %575 = vmatmul.mubr.bf16.gmra.mrb[0].mxu0 %v367
  %v576 = vpop.f32.mrb[0].mxu0
  %v577 = vadd.f32 0.0, %v576
  %v578 = vpop.f32.mrb[0].mxu0
  %v579 = vpop.f32.mrb[0].mxu0
  %v580 = vadd.f32 0.0, %v579
  %v581 = vpop.f32.mrb[0].mxu0
  %582 = vmatprep.mubr.bf16.mxu0 0
  %583 = vmatmul.mubr.bf16.gmra.mrb[0].mxu0 %v368
  %v584 = vpop.f32.mrb[0].mxu0
  %v585 = vadd.f32 0.0, %v584
  %v586 = vpop.f32.mrb[0].mxu0
  %v587 = vpop.f32.mrb[0].mxu0
  %v588 = vadd.f32 0.0, %v587
  %v589 = vpop.f32.mrb[0].mxu0
  %590 = vmatprep.mubr.bf16.mxu0 0
  %591 = vmatmul.mubr.bf16.gmra.mrb[0].mxu0 %v369
  %v592 = vpop.f32.mrb[0].mxu0
  %v593 = vadd.f32 0.0, %v592
  %v594 = vpop.f32.mrb[0].mxu0
  %v595 = vpop.f32.mrb[0].mxu0
  %v596 = vadd.f32 0.0, %v595
  %v597 = vpop.f32.mrb[0].mxu0
  %598 = vmatprep.mubr.bf16.mxu0 0
  %599 = vmatmul.mubr.bf16.gmra.mrb[0].mxu0 %v370
  %v600 = vpop.f32.mrb[0].mxu0
  %v601 = vadd.f32 0.0, %v600
  %v602 = vpop.f32.mrb[0].mxu0
  %v603 = vpop.f32.mrb[0].mxu0
  %v604 = vadd.f32 0.0, %v603
  %v605 = vpop.f32.mrb[0].mxu0
  %606 = vmatprep.mubr.bf16.mxu0 0
  %607 = vmatmul.mubr.bf16.gmra.mrb[0].mxu0 %v371
  %v608 = vpop.f32.mrb[0].mxu0
  %v609 = vadd.f32 0.0, %v608
  %v610 = vpop.f32.mrb[0].mxu0
  %v611 = vpop.f32.mrb[0].mxu0
  %v612 = vadd.f32 0.0, %v611
  %v613 = vpop.f32.mrb[0].mxu0
  %614 = vmatprep.mubr.bf16.mxu0 0
  %615 = vmatmul.mubr.bf16.gmra.mrb[0].mxu0 %v372
  %v616 = vpop.f32.mrb[0].mxu0
  %v617 = vadd.f32 0.0, %v616
  %v618 = vpop.f32.mrb[0].mxu0
  %v619 = vpop.f32.mrb[0].mxu0
  %v620 = vadd.f32 0.0, %v619
  %v621 = vpop.f32.mrb[0].mxu0
  %622 = vmatprep.mubr.bf16.mxu0 0
  %623 = vmatmul.mubr.bf16.gmra.mrb[0].mxu0 %v373
  %v624 = vpop.f32.mrb[0].mxu0
  %v625 = vadd.f32 0.0, %v624
  %v626 = vpop.f32.mrb[0].mxu0
  %v627 = vpop.f32.mrb[0].mxu0
  %v628 = vadd.f32 0.0, %v627
  %v629 = vpop.f32.mrb[0].mxu0
  %630 = vmatprep.mubr.bf16.mxu0 0
  %631 = vmatmul.mubr.bf16.gmra.mrb[0].mxu0 %v374
  %v632 = vpop.f32.mrb[0].mxu0
  %v633 = vadd.f32 0.0, %v632
  %v634 = vpop.f32.mrb[0].mxu0
  %v635 = vpop.f32.mrb[0].mxu0
  %v636 = vadd.f32 0.0, %v635
  %v637 = vpop.f32.mrb[0].mxu0
  %638 = vmatprep.mubr.bf16.mxu0 0
  %639 = vmatmul.mubr.bf16.gmra.mrb[0].mxu0 %v375
  %v640 = vpop.f32.mrb[0].mxu0
  %v641 = vadd.f32 0.0, %v640
  %v642 = vpop.f32.mrb[0].mxu0
  %v643 = vpop.f32.mrb[0].mxu0
  %v644 = vadd.f32 0.0, %v643
  %v645 = vpop.f32.mrb[0].mxu0
  %646 = vmatprep.mubr.bf16.mxu0 0
  %647 = vmatmul.mubr.bf16.gmra.mrb[0].mxu0 %v376
  %v648 = vpop.f32.mrb[0].mxu0
  %v649 = vadd.f32 0.0, %v648
  %v650 = vpop.f32.mrb[0].mxu0
  %v651 = vpop.f32.mrb[0].mxu0
  %v652 = vadd.f32 0.0, %v651
  %v653 = vpop.f32.mrb[0].mxu0
  %654 = vmatprep.mubr.bf16.mxu0 0
  %655 = vmatmul.mubr.bf16.gmra.mrb[0].mxu0 %v377
  %v656 = vpop.f32.mrb[0].mxu0
  %v657 = vadd.f32 0.0, %v656
  %v658 = vpop.f32.mrb[0].mxu0
  %v659 = vpop.f32.mrb[0].mxu0
  %v660 = vadd.f32 0.0, %v659
  %v661 = vpop.f32.mrb[0].mxu0
  %662 = vmatprep.mubr.bf16.mxu0 0
  %663 = vmatmul.mubr.bf16.gmra.mrb[0].mxu0 %v378
  %v664 = vpop.f32.mrb[0].mxu0
  %v665 = vadd.f32 0.0, %v664
  %v666 = vpop.f32.mrb[0].mxu0
  %v667 = vpop.f32.mrb[0].mxu0
  %v668 = vadd.f32 0.0, %v667
  %v669 = vpop.f32.mrb[0].mxu0
  %670 = vmatprep.mubr.bf16.mxu0 0
  %671 = vmatmul.mubr.bf16.gmra.mrb[0].mxu0 %v379
  %v672 = vpop.f32.mrb[0].mxu0
  %v673 = vadd.f32 0.0, %v672
  %v674 = vpop.f32.mrb[0].mxu0
  %v675 = vpop.f32.mrb[0].mxu0
  %v676 = vadd.f32 0.0, %v675
  %v677 = vpop.f32.mrb[0].mxu0
  %678 = vmatprep.mubr.bf16.mxu0 0
  %679 = vmatmul.mubr.bf16.gmra.mrb[0].mxu0 %v380
  %v680 = vpop.f32.mrb[0].mxu0
  %v681 = vadd.f32 0.0, %v680
  %v682 = vpop.f32.mrb[0].mxu0
  %v683 = vpop.f32.mrb[0].mxu0
  %v684 = vadd.f32 0.0, %v683
  %v685 = vpop.f32.mrb[0].mxu0
  %686 = vmatprep.mubr.bf16.mxu0 0
  %687 = vmatmul.mubr.bf16.gmra.mrb[0].mxu0 %v381
  %v688 = vpop.f32.mrb[0].mxu0
  %v689 = vadd.f32 0.0, %v688
  %v690 = vpop.f32.mrb[0].mxu0
  %v691 = vpop.f32.mrb[0].mxu0
  %v692 = vadd.f32 0.0, %v691
  %v693 = vpop.f32.mrb[0].mxu0
  %694 = vmatprep.mubr.bf16.mxu0 0
  %695 = vmatmul.mubr.bf16.gmra.mrb[0].mxu0 %v382
  %v696 = vpop.f32.mrb[0].mxu0
  %v697 = vadd.f32 0.0, %v696
  %v698 = vpop.f32.mrb[0].mxu0
  %v699 = vpop.f32.mrb[0].mxu0
  %v700 = vadd.f32 0.0, %v699
  %v701 = vpop.f32.mrb[0].mxu0
  %702 = vmatprep.mubr.bf16.mxu0 0
  %703 = vmatmul.mubr.bf16.gmra.mrb[0].mxu0 %v383
  %v704 = vpop.f32.mrb[0].mxu0
  %v705 = vadd.f32 0.0, %v704
  %v706 = vpop.f32.mrb[0].mxu0
  %v707 = vpop.f32.mrb[0].mxu0
  %v708 = vadd.f32 0.0, %v707
  %v709 = vpop.f32.mrb[0].mxu0
  %710 = vmatprep.mubr.bf16.mxu0 0
  %711 = vmatmul.mubr.bf16.gmra.mrb[0].mxu0 %v384
  %v712 = vpop.f32.mrb[0].mxu0
  %v713 = vadd.f32 0.0, %v712
  %v714 = vpop.f32.mrb[0].mxu0
  %v715 = vpop.f32.mrb[0].mxu0
  %v716 = vadd.f32 0.0, %v715
  %v717 = vpop.f32.mrb[0].mxu0
  %718 = vmatprep.mubr.bf16.mxu0 0
  %719 = vmatmul.mubr.bf16.gmra.mrb[0].mxu0 %v385
  %v720 = vpop.f32.mrb[0].mxu0
  %v721 = vadd.f32 0.0, %v720
  %v722 = vpop.f32.mrb[0].mxu0
  %v723 = vpop.f32.mrb[0].mxu0
  %v724 = vadd.f32 0.0, %v723
  %v725 = vpop.f32.mrb[0].mxu0
  %726 = vmatprep.mubr.bf16.mxu0 0
  %727 = vmatmul.mubr.bf16.gmra.mrb[0].mxu0 %v386
  %v728 = vpop.f32.mrb[0].mxu0
  %v729 = vadd.f32 0.0, %v728
  %v730 = vpop.f32.mrb[0].mxu0
  %v731 = vpop.f32.mrb[0].mxu0
  %v732 = vadd.f32 0.0, %v731
  %v733 = vpop.f32.mrb[0].mxu0
  %734 = vmatprep.mubr.bf16.mxu0 0
  %735 = vmatmul.mubr.bf16.gmra.mrb[0].mxu0 %v387
  %v736 = vpop.f32.mrb[0].mxu0
  %v737 = vadd.f32 0.0, %v736
  %v738 = vpop.f32.mrb[0].mxu0
  %v739 = vpop.f32.mrb[0].mxu0
  %v740 = vadd.f32 0.0, %v739
  %v741 = vpop.f32.mrb[0].mxu0
  %742 = vmatprep.mubr.bf16.mxu0 0
  %743 = vmatmul.mubr.bf16.gmra.mrb[0].mxu0 %v388
  %v744 = vpop.f32.mrb[0].mxu0
  %v745 = vadd.f32 0.0, %v744
  %v746 = vpop.f32.mrb[0].mxu0
  %v747 = vpop.f32.mrb[0].mxu0
  %v748 = vadd.f32 0.0, %v747
  %v749 = vpop.f32.mrb[0].mxu0
  %750 = vmatprep.mubr.bf16.mxu0 0
  %751 = vmatmul.mubr.bf16.gmra.mrb[0].mxu0 %v389
  %v752 = vpop.f32.mrb[0].mxu0
  %v753 = vadd.f32 0.0, %v752
  %v754 = vpop.f32.mrb[0].mxu0
  %v755 = vpop.f32.mrb[0].mxu0
  %v756 = vadd.f32 0.0, %v755
  %v757 = vpop.f32.mrb[0].mxu0
  %758 = vdwg.mxu0
  %v759 = vadd.f32 %v86, %v505
  %v760 = vadd.f32 %v87, %v508
  %v761 = vadd.f32 %v88, %v513
  %v762 = vadd.f32 %v89, %v516
  %v763 = vadd.f32 %v90, %v521
  %v764 = vadd.f32 %v91, %v524
  %v765 = vadd.f32 %v92, %v529
  %v766 = vadd.f32 %v93, %v532
  %v767 = vadd.f32 %v94, %v537
  %v768 = vadd.f32 %v95, %v540
  %v769 = vadd.f32 %v96, %v545
  %v770 = vadd.f32 %v97, %v548
  %v771 = vadd.f32 %v98, %v553
  %v772 = vadd.f32 %v99, %v556
  %v773 = vadd.f32 %v100, %v561
  %v774 = vadd.f32 %v101, %v564
  %v775 = vadd.f32 %v102, %v569
  %v776 = vadd.f32 %v103, %v572
  %v777 = vadd.f32 %v104, %v577
  %v778 = vadd.f32 %v105, %v580
  %v779 = vadd.f32 %v106, %v585
  %v780 = vadd.f32 %v107, %v588
  %v781 = vadd.f32 %v108, %v593
  %v782 = vadd.f32 %v109, %v596
  %v783 = vadd.f32 %v110, %v601
  %v784 = vadd.f32 %v111, %v604
  %v785 = vadd.f32 %v112, %v609
  %v786 = vadd.f32 %v113, %v612
  %v787 = vadd.f32 %v114, %v617
  %v788 = vadd.f32 %v115, %v620
  %v789 = vadd.f32 %v116, %v625
  %v790 = vadd.f32 %v117, %v628
  %v791 = vadd.f32 %v118, %v633
  %v792 = vadd.f32 %v119, %v636
  %v793 = vadd.f32 %v120, %v641
  %v794 = vadd.f32 %v121, %v644
  %v795 = vadd.f32 %v122, %v649
  %v796 = vadd.f32 %v123, %v652
  %v797 = vadd.f32 %v124, %v657
  %v798 = vadd.f32 %v125, %v660
  %v799 = vadd.f32 %v126, %v665
  %v800 = vadd.f32 %v127, %v668
  %v801 = vadd.f32 %v128, %v673
  %v802 = vadd.f32 %v129, %v676
  %v803 = vadd.f32 %v130, %v681
  %v804 = vadd.f32 %v131, %v684
  %v805 = vadd.f32 %v132, %v689
  %v806 = vadd.f32 %v133, %v692
  %v807 = vadd.f32 %v134, %v697
  %v808 = vadd.f32 %v135, %v700
  %v809 = vadd.f32 %v136, %v705
  %v810 = vadd.f32 %v137, %v708
  %v811 = vadd.f32 %v138, %v713
  %v812 = vadd.f32 %v139, %v716
  %v813 = vadd.f32 %v140, %v721
  %v814 = vadd.f32 %v141, %v724
  %v815 = vadd.f32 %v142, %v729
  %v816 = vadd.f32 %v143, %v732
  %v817 = vadd.f32 %v144, %v737
  %v818 = vadd.f32 %v145, %v740
  %v819 = vadd.f32 %v146, %v745
  %v820 = vadd.f32 %v147, %v748
  %v821 = vadd.f32 %v148, %v753
  %v822 = vadd.f32 %v149, %v756
  %823 = vst [vmem:[#allocation2] sm:$0xff] %v759
  %824 = vst [vmem:[#allocation2 + $0x8] sm:$0xff] %v760
  %825 = vst [vmem:[#allocation2 + $0x10] sm:$0xff] %v761
  %826 = vst [vmem:[#allocation2 + $0x18] sm:$0xff] %v762
  %827 = vst [vmem:[#allocation2 + $0x20] sm:$0xff] %v763
  %828 = vst [vmem:[#allocation2 + $0x28] sm:$0xff] %v764
  %829 = vst [vmem:[#allocation2 + $0x30] sm:$0xff] %v765
  %830 = vst [vmem:[#allocation2 + $0x38] sm:$0xff] %v766
  %831 = vst [vmem:[#allocation2 + $0x40] sm:$0xff] %v767
  %832 = vst [vmem:[#allocation2 + $0x48] sm:$0xff] %v768
  %833 = vst [vmem:[#allocation2 + $0x50] sm:$0xff] %v769
  %834 = vst [vmem:[#allocation2 + $0x58] sm:$0xff] %v770
  %835 = vst [vmem:[#allocation2 + $0x60] sm:$0xff] %v771
  %836 = vst [vmem:[#allocation2 + $0x68] sm:$0xff] %v772
  %837 = vst [vmem:[#allocation2 + $0x70] sm:$0xff] %v773
  %838 = vst [vmem:[#allocation2 + $0x78] sm:$0xff] %v774
  %839 = vst [vmem:[#allocation2 + $0x80] sm:$0xff] %v775
  %840 = vst [vmem:[#allocation2 + $0x88] sm:$0xff] %v776
  %841 = vst [vmem:[#allocation2 + $0x90] sm:$0xff] %v777
  %842 = vst [vmem:[#allocation2 + $0x98] sm:$0xff] %v778
  %843 = vst [vmem:[#allocation2 + $0xa0] sm:$0xff] %v779
  %844 = vst [vmem:[#allocation2 + $0xa8] sm:$0xff] %v780
  %845 = vst [vmem:[#allocation2 + $0xb0] sm:$0xff] %v781
  %846 = vst [vmem:[#allocation2 + $0xb8] sm:$0xff] %v782
  %847 = vst [vmem:[#allocation2 + $0xc0] sm:$0xff] %v783
  %848 = vst [vmem:[#allocation2 + $0xc8] sm:$0xff] %v784
  %849 = vst [vmem:[#allocation2 + $0xd0] sm:$0xff] %v785
  %850 = vst [vmem:[#allocation2 + $0xd8] sm:$0xff] %v786
  %851 = vst [vmem:[#allocation2 + $0xe0] sm:$0xff] %v787
  %852 = vst [vmem:[#allocation2 + $0xe8] sm:$0xff] %v788
  %853 = vst [vmem:[#allocation2 + $0xf0] sm:$0xff] %v789
  %854 = vst [vmem:[#allocation2 + $0xf8] sm:$0xff] %v790
  %855 = vst [vmem:[#allocation2 + $0x100] sm:$0xff] %v791
  %856 = vst [vmem:[#allocation2 + $0x108] sm:$0xff] %v792
  %857 = vst [vmem:[#allocation2 + $0x110] sm:$0xff] %v793
  %858 = vst [vmem:[#allocation2 + $0x118] sm:$0xff] %v794
  %859 = vst [vmem:[#allocation2 + $0x120] sm:$0xff] %v795
  %860 = vst [vmem:[#allocation2 + $0x128] sm:$0xff] %v796
  %861 = vst [vmem:[#allocation2 + $0x130] sm:$0xff] %v797
  %862 = vst [vmem:[#allocation2 + $0x138] sm:$0xff] %v798
  %863 = vst [vmem:[#allocation2 + $0x140] sm:$0xff] %v799
  %864 = vst [vmem:[#allocation2 + $0x148] sm:$0xff] %v800
  %865 = vst [vmem:[#allocation2 + $0x150] sm:$0xff] %v801
  %866 = vst [vmem:[#allocation2 + $0x158] sm:$0xff] %v802
  %867 = vst [vmem:[#allocation2 + $0x160] sm:$0xff] %v803
  %868 = vst [vmem:[#allocation2 + $0x168] sm:$0xff] %v804
  %869 = vst [vmem:[#allocation2 + $0x170] sm:$0xff] %v805
  %870 = vst [vmem:[#allocation2 + $0x178] sm:$0xff] %v806
  %871 = vst [vmem:[#allocation2 + $0x180] sm:$0xff] %v807
  %872 = vst [vmem:[#allocation2 + $0x188] sm:$0xff] %v808
  %873 = vst [vmem:[#allocation2 + $0x190] sm:$0xff] %v809
  %874 = vst [vmem:[#allocation2 + $0x198] sm:$0xff] %v810
  %875 = vst [vmem:[#allocation2 + $0x1a0] sm:$0xff] %v811
  %876 = vst [vmem:[#allocation2 + $0x1a8] sm:$0xff] %v812
  %877 = vst [vmem:[#allocation2 + $0x1b0] sm:$0xff] %v813
  %878 = vst [vmem:[#allocation2 + $0x1b8] sm:$0xff] %v814
  %879 = vst [vmem:[#allocation2 + $0x1c0] sm:$0xff] %v815
  %880 = vst [vmem:[#allocation2 + $0x1c8] sm:$0xff] %v816
  %881 = vst [vmem:[#allocation2 + $0x1d0] sm:$0xff] %v817
  %882 = vst [vmem:[#allocation2 + $0x1d8] sm:$0xff] %v818
  %883 = vst [vmem:[#allocation2 + $0x1e0] sm:$0xff] %v819
  %884 = vst [vmem:[#allocation2 + $0x1e8] sm:$0xff] %v820
  %885 = vst [vmem:[#allocation2 + $0x1f0] sm:$0xff] %v821
  %886 = vst [vmem:[#allocation2 + $0x1f8] sm:$0xff] %v822
  // Predicated region
  $region22: #{residual_block_forward.3} parent=0 // pred_check
    %p887 = pneg %p18
  $region23: #{residual_block_forward.3} parent=0 // pred_check_branch
    %889 = sbr.rel (%p887) target = $region25
  $region24: #{residual_block_forward.3} parent=0 // pred_region
    %v890 = vld [vmem:[#allocation2] sm:$0xff]
    %v891 = vld [vmem:[#allocation2 + $0x8] sm:$0xff]
    %v892 = vld [vmem:[#allocation2 + $0x10] sm:$0xff]
    %v893 = vld [vmem:[#allocation2 + $0x18] sm:$0xff]
    %v894 = vld [vmem:[#allocation2 + $0x20] sm:$0xff]
    %v895 = vld [vmem:[#allocation2 + $0x28] sm:$0xff]
    %v896 = vld [vmem:[#allocation2 + $0x30] sm:$0xff]
    %v897 = vld [vmem:[#allocation2 + $0x38] sm:$0xff]
    %v898 = vld [vmem:[#allocation2 + $0x40] sm:$0xff]
    %v899 = vld [vmem:[#allocation2 + $0x48] sm:$0xff]
    %v900 = vld [vmem:[#allocation2 + $0x50] sm:$0xff]
    %v901 = vld [vmem:[#allocation2 + $0x58] sm:$0xff]
    %v902 = vld [vmem:[#allocation2 + $0x60] sm:$0xff]
    %v903 = vld [vmem:[#allocation2 + $0x68] sm:$0xff]
    %v904 = vld [vmem:[#allocation2 + $0x70] sm:$0xff]
    %v905 = vld [vmem:[#allocation2 + $0x78] sm:$0xff]
    %v906 = vld [vmem:[#allocation2 + $0x80] sm:$0xff]
    %v907 = vld [vmem:[#allocation2 + $0x88] sm:$0xff]
    %v908 = vld [vmem:[#allocation2 + $0x90] sm:$0xff]
    %v909 = vld [vmem:[#allocation2 + $0x98] sm:$0xff]
    %v910 = vld [vmem:[#allocation2 + $0xa0] sm:$0xff]
    %v911 = vld [vmem:[#allocation2 + $0xa8] sm:$0xff]
    %v912 = vld [vmem:[#allocation2 + $0xb0] sm:$0xff]
    %v913 = vld [vmem:[#allocation2 + $0xb8] sm:$0xff]
    %v914 = vld [vmem:[#allocation2 + $0xc0] sm:$0xff]
    %v915 = vld [vmem:[#allocation2 + $0xc8] sm:$0xff]
    %v916 = vld [vmem:[#allocation2 + $0xd0] sm:$0xff]
    %v917 = vld [vmem:[#allocation2 + $0xd8] sm:$0xff]
    %v918 = vld [vmem:[#allocation2 + $0xe0] sm:$0xff]
    %v919 = vld [vmem:[#allocation2 + $0xe8] sm:$0xff]
    %v920 = vld [vmem:[#allocation2 + $0xf0] sm:$0xff]
    %v921 = vld [vmem:[#allocation2 + $0xf8] sm:$0xff]
    %v922 = vld [vmem:[#allocation2 + $0x100] sm:$0xff]
    %v923 = vld [vmem:[#allocation2 + $0x108] sm:$0xff]
    %v924 = vld [vmem:[#allocation2 + $0x110] sm:$0xff]
    %v925 = vld [vmem:[#allocation2 + $0x118] sm:$0xff]
    %v926 = vld [vmem:[#allocation2 + $0x120] sm:$0xff]
    %v927 = vld [vmem:[#allocation2 + $0x128] sm:$0xff]
    %v928 = vld [vmem:[#allocation2 + $0x130] sm:$0xff]
    %v929 = vld [vmem:[#allocation2 + $0x138] sm:$0xff]
    %v930 = vld [vmem:[#allocation2 + $0x140] sm:$0xff]
    %v931 = vld [vmem:[#allocation2 + $0x148] sm:$0xff]
    %v932 = vld [vmem:[#allocation2 + $0x150] sm:$0xff]
    %v933 = vld [vmem:[#allocation2 + $0x158] sm:$0xff]
    %v934 = vld [vmem:[#allocation2 + $0x160] sm:$0xff]
    %v935 = vld [vmem:[#allocation2 + $0x168] sm:$0xff]
    %v936 = vld [vmem:[#allocation2 + $0x170] sm:$0xff]
    %v937 = vld [vmem:[#allocation2 + $0x178] sm:$0xff]
    %v938 = vld [vmem:[#allocation2 + $0x180] sm:$0xff]
    %v939 = vld [vmem:[#allocation2 + $0x188] sm:$0xff]
    %v940 = vld [vmem:[#allocation2 + $0x190] sm:$0xff]
    %v941 = vld [vmem:[#allocation2 + $0x198] sm:$0xff]
    %v942 = vld [vmem:[#allocation2 + $0x1a0] sm:$0xff]
    %v943 = vld [vmem:[#allocation2 + $0x1a8] sm:$0xff]
    %v944 = vld [vmem:[#allocation2 + $0x1b0] sm:$0xff]
    %v945 = vld [vmem:[#allocation2 + $0x1b8] sm:$0xff]
    %v946 = vld [vmem:[#allocation2 + $0x1c0] sm:$0xff]
    %v947 = vld [vmem:[#allocation2 + $0x1c8] sm:$0xff]
    %v948 = vld [vmem:[#allocation2 + $0x1d0] sm:$0xff]
    %v949 = vld [vmem:[#allocation2 + $0x1d8] sm:$0xff]
    %v950 = vld [vmem:[#allocation2 + $0x1e0] sm:$0xff]
    %v951 = vld [vmem:[#allocation2 + $0x1e8] sm:$0xff]
    %v952 = vld [vmem:[#allocation2 + $0x1f0] sm:$0xff]
    %v953 = vld [vmem:[#allocation2 + $0x1f8] sm:$0xff]
    %v954 = vld [vmem:[%s2] sm:$0x1]
    %v956 = vlaneseq
    %v957 = vshrl.u32 %v956, 7
    %v958 = vsub.s32 0, %v957
    %v959 = vrot.slane %v954, %v958
    %v961 = vadd.f32 %v890, %v959
    %v962 = vadd.f32 %v891, %v959
    %v963 = vadd.f32 %v892, %v959
    %v964 = vadd.f32 %v893, %v959
    %v965 = vadd.f32 %v894, %v959
    %v966 = vadd.f32 %v895, %v959
    %v967 = vadd.f32 %v896, %v959
    %v968 = vadd.f32 %v897, %v959
    %v969 = vadd.f32 %v898, %v959
    %v970 = vadd.f32 %v899, %v959
    %v971 = vadd.f32 %v900, %v959
    %v972 = vadd.f32 %v901, %v959
    %v973 = vadd.f32 %v902, %v959
    %v974 = vadd.f32 %v903, %v959
    %v975 = vadd.f32 %v904, %v959
    %v976 = vadd.f32 %v905, %v959
    %v977 = vadd.f32 %v906, %v959
    %v978 = vadd.f32 %v907, %v959
    %v979 = vadd.f32 %v908, %v959
    %v980 = vadd.f32 %v909, %v959
    %v981 = vadd.f32 %v910, %v959
    %v982 = vadd.f32 %v911, %v959
    %v983 = vadd.f32 %v912, %v959
    %v984 = vadd.f32 %v913, %v959
    %v985 = vadd.f32 %v914, %v959
    %v986 = vadd.f32 %v915, %v959
    %v987 = vadd.f32 %v916, %v959
    %v988 = vadd.f32 %v917, %v959
    %v989 = vadd.f32 %v918, %v959
    %v990 = vadd.f32 %v919, %v959
    %v991 = vadd.f32 %v920, %v959
    %v992 = vadd.f32 %v921, %v959
    %v993 = vadd.f32 %v922, %v959
    %v994 = vadd.f32 %v923, %v959
    %v995 = vadd.f32 %v924, %v959
    %v996 = vadd.f32 %v925, %v959
    %v997 = vadd.f32 %v926, %v959
    %v998 = vadd.f32 %v927, %v959
    %v999 = vadd.f32 %v928, %v959
    %v1000 = vadd.f32 %v929, %v959
    %v1001 = vadd.f32 %v930, %v959
    %v1002 = vadd.f32 %v931, %v959
    %v1003 = vadd.f32 %v932, %v959
    %v1004 = vadd.f32 %v933, %v959
    %v1005 = vadd.f32 %v934, %v959
    %v1006 = vadd.f32 %v935, %v959
    %v1007 = vadd.f32 %v936, %v959
    %v1008 = vadd.f32 %v937, %v959
    %v1009 = vadd.f32 %v938, %v959
    %v1010 = vadd.f32 %v939, %v959
    %v1011 = vadd.f32 %v940, %v959
    %v1012 = vadd.f32 %v941, %v959
    %v1013 = vadd.f32 %v942, %v959
    %v1014 = vadd.f32 %v943, %v959
    %v1015 = vadd.f32 %v944, %v959
    %v1016 = vadd.f32 %v945, %v959
    %v1017 = vadd.f32 %v946, %v959
    %v1018 = vadd.f32 %v947, %v959
    %v1019 = vadd.f32 %v948, %v959
    %v1020 = vadd.f32 %v949, %v959
    %v1021 = vadd.f32 %v950, %v959
    %v1022 = vadd.f32 %v951, %v959
    %v1023 = vadd.f32 %v952, %v959
    %v1024 = vadd.f32 %v953, %v959
    %v1025 = vld [vmem:[%s3] sm:$0xf]
    %v1026 = vld [vmem:[%s3 + $0x4] sm:$0xf]
    %v1027 = vld [vmem:[%s3 + $0x8] sm:$0xf]
    %v1028 = vld [vmem:[%s3 + $0xc] sm:$0xf]
    %v1029 = vld [vmem:[%s3 + $0x10] sm:$0xf]
    %v1030 = vld [vmem:[%s3 + $0x14] sm:$0xf]
    %v1031 = vld [vmem:[%s3 + $0x18] sm:$0xf]
    %v1032 = vld [vmem:[%s3 + $0x1c] sm:$0xf]
    %v1033 = vld [vmem:[%s3 + $0x20] sm:$0xf]
    %v1034 = vld [vmem:[%s3 + $0x24] sm:$0xf]
    %v1035 = vld [vmem:[%s3 + $0x28] sm:$0xf]
    %v1036 = vld [vmem:[%s3 + $0x2c] sm:$0xf]
    %v1037 = vld [vmem:[%s3 + $0x30] sm:$0xf]
    %v1038 = vld [vmem:[%s3 + $0x34] sm:$0xf]
    %v1039 = vld [vmem:[%s3 + $0x38] sm:$0xf]
    %v1040 = vld [vmem:[%s3 + $0x3c] sm:$0xf]
    %v1041 = vld [vmem:[%s3 + $0x40] sm:$0xf]
    %v1042 = vld [vmem:[%s3 + $0x44] sm:$0xf]
    %v1043 = vld [vmem:[%s3 + $0x48] sm:$0xf]
    %v1044 = vld [vmem:[%s3 + $0x4c] sm:$0xf]
    %v1045 = vld [vmem:[%s3 + $0x50] sm:$0xf]
    %v1046 = vld [vmem:[%s3 + $0x54] sm:$0xf]
    %v1047 = vld [vmem:[%s3 + $0x58] sm:$0xf]
    %v1048 = vld [vmem:[%s3 + $0x5c] sm:$0xf]
    %v1049 = vld [vmem:[%s3 + $0x60] sm:$0xf]
    %v1050 = vld [vmem:[%s3 + $0x64] sm:$0xf]
    %v1051 = vld [vmem:[%s3 + $0x68] sm:$0xf]
    %v1052 = vld [vmem:[%s3 + $0x6c] sm:$0xf]
    %v1053 = vld [vmem:[%s3 + $0x70] sm:$0xf]
    %v1054 = vld [vmem:[%s3 + $0x74] sm:$0xf]
    %v1055 = vld [vmem:[%s3 + $0x78] sm:$0xf]
    %v1056 = vld [vmem:[%s3 + $0x7c] sm:$0xf]
    %v1057 = vld [vmem:[%s3 + $0x80] sm:$0xf]
    %v1058 = vld [vmem:[%s3 + $0x84] sm:$0xf]
    %v1059 = vld [vmem:[%s3 + $0x88] sm:$0xf]
    %v1060 = vld [vmem:[%s3 + $0x8c] sm:$0xf]
    %v1061 = vld [vmem:[%s3 + $0x90] sm:$0xf]
    %v1062 = vld [vmem:[%s3 + $0x94] sm:$0xf]
    %v1063 = vld [vmem:[%s3 + $0x98] sm:$0xf]
    %v1064 = vld [vmem:[%s3 + $0x9c] sm:$0xf]
    %v1065 = vld [vmem:[%s3 + $0xa0] sm:$0xf]
    %v1066 = vld [vmem:[%s3 + $0xa4] sm:$0xf]
    %v1067 = vld [vmem:[%s3 + $0xa8] sm:$0xf]
    %v1068 = vld [vmem:[%s3 + $0xac] sm:$0xf]
    %v1069 = vld [vmem:[%s3 + $0xb0] sm:$0xf]
    %v1070 = vld [vmem:[%s3 + $0xb4] sm:$0xf]
    %v1071 = vld [vmem:[%s3 + $0xb8] sm:$0xf]
    %v1072 = vld [vmem:[%s3 + $0xbc] sm:$0xf]
    %v1073 = vld [vmem:[%s3 + $0xc0] sm:$0xf]
    %v1074 = vld [vmem:[%s3 + $0xc4] sm:$0xf]
    %v1075 = vld [vmem:[%s3 + $0xc8] sm:$0xf]
    %v1076 = vld [vmem:[%s3 + $0xcc] sm:$0xf]
    %v1077 = vld [vmem:[%s3 + $0xd0] sm:$0xf]
    %v1078 = vld [vmem:[%s3 + $0xd4] sm:$0xf]
    %v1079 = vld [vmem:[%s3 + $0xd8] sm:$0xf]
    %v1080 = vld [vmem:[%s3 + $0xdc] sm:$0xf]
    %v1081 = vld [vmem:[%s3 + $0xe0] sm:$0xf]
    %v1082 = vld [vmem:[%s3 + $0xe4] sm:$0xf]
    %v1083 = vld [vmem:[%s3 + $0xe8] sm:$0xf]
    %v1084 = vld [vmem:[%s3 + $0xec] sm:$0xf]
    %v1085 = vld [vmem:[%s3 + $0xf0] sm:$0xf]
    %v1086 = vld [vmem:[%s3 + $0xf4] sm:$0xf]
    %v1087 = vld [vmem:[%s3 + $0xf8] sm:$0xf]
    %v1088 = vld [vmem:[%s3 + $0xfc] sm:$0xf]
    %v1089 = vunpack.c.l.bf16 %v1025
    %v1090 = vunpack.c.l.bf16 %v1026
    %v1091 = vunpack.c.l.bf16 %v1027
    %v1092 = vunpack.c.l.bf16 %v1028
    %v1093 = vunpack.c.l.bf16 %v1029
    %v1094 = vunpack.c.l.bf16 %v1030
    %v1095 = vunpack.c.l.bf16 %v1031
    %v1096 = vunpack.c.l.bf16 %v1032
    %v1097 = vunpack.c.l.bf16 %v1033
    %v1098 = vunpack.c.l.bf16 %v1034
    %v1099 = vunpack.c.l.bf16 %v1035
    %v1100 = vunpack.c.l.bf16 %v1036
    %v1101 = vunpack.c.l.bf16 %v1037
    %v1102 = vunpack.c.l.bf16 %v1038
    %v1103 = vunpack.c.l.bf16 %v1039
    %v1104 = vunpack.c.l.bf16 %v1040
    %v1105 = vunpack.c.l.bf16 %v1041
    %v1106 = vunpack.c.l.bf16 %v1042
    %v1107 = vunpack.c.l.bf16 %v1043
    %v1108 = vunpack.c.l.bf16 %v1044
    %v1109 = vunpack.c.l.bf16 %v1045
    %v1110 = vunpack.c.l.bf16 %v1046
    %v1111 = vunpack.c.l.bf16 %v1047
    %v1112 = vunpack.c.l.bf16 %v1048
    %v1113 = vunpack.c.l.bf16 %v1049
    %v1114 = vunpack.c.l.bf16 %v1050
    %v1115 = vunpack.c.l.bf16 %v1051
    %v1116 = vunpack.c.l.bf16 %v1052
    %v1117 = vunpack.c.l.bf16 %v1053
    %v1118 = vunpack.c.l.bf16 %v1054
    %v1119 = vunpack.c.l.bf16 %v1055
    %v1120 = vunpack.c.l.bf16 %v1056
    %v1121 = vunpack.c.l.bf16 %v1057
    %v1122 = vunpack.c.l.bf16 %v1058
    %v1123 = vunpack.c.l.bf16 %v1059
    %v1124 = vunpack.c.l.bf16 %v1060
    %v1125 = vunpack.c.l.bf16 %v1061
    %v1126 = vunpack.c.l.bf16 %v1062
    %v1127 = vunpack.c.l.bf16 %v1063
    %v1128 = vunpack.c.l.bf16 %v1064
    %v1129 = vunpack.c.l.bf16 %v1065
    %v1130 = vunpack.c.l.bf16 %v1066
    %v1131 = vunpack.c.l.bf16 %v1067
    %v1132 = vunpack.c.l.bf16 %v1068
    %v1133 = vunpack.c.l.bf16 %v1069
    %v1134 = vunpack.c.l.bf16 %v1070
    %v1135 = vunpack.c.l.bf16 %v1071
    %v1136 = vunpack.c.l.bf16 %v1072
    %v1137 = vunpack.c.l.bf16 %v1073
    %v1138 = vunpack.c.l.bf16 %v1074
    %v1139 = vunpack.c.l.bf16 %v1075
    %v1140 = vunpack.c.l.bf16 %v1076
    %v1141 = vunpack.c.l.bf16 %v1077
    %v1142 = vunpack.c.l.bf16 %v1078
    %v1143 = vunpack.c.l.bf16 %v1079
    %v1144 = vunpack.c.l.bf16 %v1080
    %v1145 = vunpack.c.l.bf16 %v1081
    %v1146 = vunpack.c.l.bf16 %v1082
    %v1147 = vunpack.c.l.bf16 %v1083
    %v1148 = vunpack.c.l.bf16 %v1084
    %v1149 = vunpack.c.l.bf16 %v1085
    %v1150 = vunpack.c.l.bf16 %v1086
    %v1151 = vunpack.c.l.bf16 %v1087
    %v1152 = vunpack.c.l.bf16 %v1088
    %v1153 = vadd.f32 %v961, %v1089
    %v1154 = vadd.f32 %v962, %v1090
    %v1155 = vadd.f32 %v963, %v1091
    %v1156 = vadd.f32 %v964, %v1092
    %v1157 = vadd.f32 %v965, %v1093
    %v1158 = vadd.f32 %v966, %v1094
    %v1159 = vadd.f32 %v967, %v1095
    %v1160 = vadd.f32 %v968, %v1096
    %v1161 = vadd.f32 %v969, %v1097
    %v1162 = vadd.f32 %v970, %v1098
    %v1163 = vadd.f32 %v971, %v1099
    %v1164 = vadd.f32 %v972, %v1100
    %v1165 = vadd.f32 %v973, %v1101
    %v1166 = vadd.f32 %v974, %v1102
    %v1167 = vadd.f32 %v975, %v1103
    %v1168 = vadd.f32 %v976, %v1104
    %v1169 = vadd.f32 %v977, %v1105
    %v1170 = vadd.f32 %v978, %v1106
    %v1171 = vadd.f32 %v979, %v1107
    %v1172 = vadd.f32 %v980, %v1108
    %v1173 = vadd.f32 %v981, %v1109
    %v1174 = vadd.f32 %v982, %v1110
    %v1175 = vadd.f32 %v983, %v1111
    %v1176 = vadd.f32 %v984, %v1112
    %v1177 = vadd.f32 %v985, %v1113
    %v1178 = vadd.f32 %v986, %v1114
    %v1179 = vadd.f32 %v987, %v1115
    %v1180 = vadd.f32 %v988, %v1116
    %v1181 = vadd.f32 %v989, %v1117
    %v1182 = vadd.f32 %v990, %v1118
    %v1183 = vadd.f32 %v991, %v1119
    %v1184 = vadd.f32 %v992, %v1120
    %v1185 = vadd.f32 %v993, %v1121
    %v1186 = vadd.f32 %v994, %v1122
    %v1187 = vadd.f32 %v995, %v1123
    %v1188 = vadd.f32 %v996, %v1124
    %v1189 = vadd.f32 %v997, %v1125
    %v1190 = vadd.f32 %v998, %v1126
    %v1191 = vadd.f32 %v999, %v1127
    %v1192 = vadd.f32 %v1000, %v1128
    %v1193 = vadd.f32 %v1001, %v1129
    %v1194 = vadd.f32 %v1002, %v1130
    %v1195 = vadd.f32 %v1003, %v1131
    %v1196 = vadd.f32 %v1004, %v1132
    %v1197 = vadd.f32 %v1005, %v1133
    %v1198 = vadd.f32 %v1006, %v1134
    %v1199 = vadd.f32 %v1007, %v1135
    %v1200 = vadd.f32 %v1008, %v1136
    %v1201 = vadd.f32 %v1009, %v1137
    %v1202 = vadd.f32 %v1010, %v1138
    %v1203 = vadd.f32 %v1011, %v1139
    %v1204 = vadd.f32 %v1012, %v1140
    %v1205 = vadd.f32 %v1013, %v1141
    %v1206 = vadd.f32 %v1014, %v1142
    %v1207 = vadd.f32 %v1015, %v1143
    %v1208 = vadd.f32 %v1016, %v1144
    %v1209 = vadd.f32 %v1017, %v1145
    %v1210 = vadd.f32 %v1018, %v1146
    %v1211 = vadd.f32 %v1019, %v1147
    %v1212 = vadd.f32 %v1020, %v1148
    %v1213 = vadd.f32 %v1021, %v1149
    %v1214 = vadd.f32 %v1022, %v1150
    %v1215 = vadd.f32 %v1023, %v1151
    %v1216 = vadd.f32 %v1024, %v1152
    %v1217 = vmax.f32 %v1153, 0.0
    %v1218 = vmax.f32 %v1154, 0.0
    %v1219 = vmax.f32 %v1155, 0.0
    %v1220 = vmax.f32 %v1156, 0.0
    %v1221 = vmax.f32 %v1157, 0.0
    %v1222 = vmax.f32 %v1158, 0.0
    %v1223 = vmax.f32 %v1159, 0.0
    %v1224 = vmax.f32 %v1160, 0.0
    %v1225 = vmax.f32 %v1161, 0.0
    %v1226 = vmax.f32 %v1162, 0.0
    %v1227 = vmax.f32 %v1163, 0.0
    %v1228 = vmax.f32 %v1164, 0.0
    %v1229 = vmax.f32 %v1165, 0.0
    %v1230 = vmax.f32 %v1166, 0.0
    %v1231 = vmax.f32 %v1167, 0.0
    %v1232 = vmax.f32 %v1168, 0.0
    %v1233 = vmax.f32 %v1169, 0.0
    %v1234 = vmax.f32 %v1170, 0.0
    %v1235 = vmax.f32 %v1171, 0.0
    %v1236 = vmax.f32 %v1172, 0.0
    %v1237 = vmax.f32 %v1173, 0.0
    %v1238 = vmax.f32 %v1174, 0.0
    %v1239 = vmax.f32 %v1175, 0.0
    %v1240 = vmax.f32 %v1176, 0.0
    %v1241 = vmax.f32 %v1177, 0.0
    %v1242 = vmax.f32 %v1178, 0.0
    %v1243 = vmax.f32 %v1179, 0.0
    %v1244 = vmax.f32 %v1180, 0.0
    %v1245 = vmax.f32 %v1181, 0.0
    %v1246 = vmax.f32 %v1182, 0.0
    %v1247 = vmax.f32 %v1183, 0.0
    %v1248 = vmax.f32 %v1184, 0.0
    %v1249 = vmax.f32 %v1185, 0.0
    %v1250 = vmax.f32 %v1186, 0.0
    %v1251 = vmax.f32 %v1187, 0.0
    %v1252 = vmax.f32 %v1188, 0.0
    %v1253 = vmax.f32 %v1189, 0.0
    %v1254 = vmax.f32 %v1190, 0.0
    %v1255 = vmax.f32 %v1191, 0.0
    %v1256 = vmax.f32 %v1192, 0.0
    %v1257 = vmax.f32 %v1193, 0.0
    %v1258 = vmax.f32 %v1194, 0.0
    %v1259 = vmax.f32 %v1195, 0.0
    %v1260 = vmax.f32 %v1196, 0.0
    %v1261 = vmax.f32 %v1197, 0.0
    %v1262 = vmax.f32 %v1198, 0.0
    %v1263 = vmax.f32 %v1199, 0.0
    %v1264 = vmax.f32 %v1200, 0.0
    %v1265 = vmax.f32 %v1201, 0.0
    %v1266 = vmax.f32 %v1202, 0.0
    %v1267 = vmax.f32 %v1203, 0.0
    %v1268 = vmax.f32 %v1204, 0.0
    %v1269 = vmax.f32 %v1205, 0.0
    %v1270 = vmax.f32 %v1206, 0.0
    %v1271 = vmax.f32 %v1207, 0.0
    %v1272 = vmax.f32 %v1208, 0.0
    %v1273 = vmax.f32 %v1209, 0.0
    %v1274 = vmax.f32 %v1210, 0.0
    %v1275 = vmax.f32 %v1211, 0.0
    %v1276 = vmax.f32 %v1212, 0.0
    %v1277 = vmax.f32 %v1213, 0.0
    %v1278 = vmax.f32 %v1214, 0.0
    %v1279 = vmax.f32 %v1215, 0.0
    %v1280 = vmax.f32 %v1216, 0.0
    %1281 = vst [vmem:[%s4] sm:$0xff] %v1217
    %1282 = vst [vmem:[%s4 + $0x8] sm:$0xff] %v1218
    %1283 = vst [vmem:[%s4 + $0x10] sm:$0xff] %v1219
    %1284 = vst [vmem:[%s4 + $0x18] sm:$0xff] %v1220
    %1285 = vst [vmem:[%s4 + $0x20] sm:$0xff] %v1221
    %1286 = vst [vmem:[%s4 + $0x28] sm:$0xff] %v1222
    %1287 = vst [vmem:[%s4 + $0x30] sm:$0xff] %v1223
    %1288 = vst [vmem:[%s4 + $0x38] sm:$0xff] %v1224
    %1289 = vst [vmem:[%s4 + $0x40] sm:$0xff] %v1225
    %1290 = vst [vmem:[%s4 + $0x48] sm:$0xff] %v1226
    %1291 = vst [vmem:[%s4 + $0x50] sm:$0xff] %v1227
    %1292 = vst [vmem:[%s4 + $0x58] sm:$0xff] %v1228
    %1293 = vst [vmem:[%s4 + $0x60] sm:$0xff] %v1229
    %1294 = vst [vmem:[%s4 + $0x68] sm:$0xff] %v1230
    %1295 = vst [vmem:[%s4 + $0x70] sm:$0xff] %v1231
    %1296 = vst [vmem:[%s4 + $0x78] sm:$0xff] %v1232
    %1297 = vst [vmem:[%s4 + $0x80] sm:$0xff] %v1233
    %1298 = vst [vmem:[%s4 + $0x88] sm:$0xff] %v1234
    %1299 = vst [vmem:[%s4 + $0x90] sm:$0xff] %v1235
    %1300 = vst [vmem:[%s4 + $0x98] sm:$0xff] %v1236
    %1301 = vst [vmem:[%s4 + $0xa0] sm:$0xff] %v1237
    %1302 = vst [vmem:[%s4 + $0xa8] sm:$0xff] %v1238
    %1303 = vst [vmem:[%s4 + $0xb0] sm:$0xff] %v1239
    %1304 = vst [vmem:[%s4 + $0xb8] sm:$0xff] %v1240
    %1305 = vst [vmem:[%s4 + $0xc0] sm:$0xff] %v1241
    %1306 = vst [vmem:[%s4 + $0xc8] sm:$0xff] %v1242
    %1307 = vst [vmem:[%s4 + $0xd0] sm:$0xff] %v1243
    %1308 = vst [vmem:[%s4 + $0xd8] sm:$0xff] %v1244
    %1309 = vst [vmem:[%s4 + $0xe0] sm:$0xff] %v1245
    %1310 = vst [vmem:[%s4 + $0xe8] sm:$0xff] %v1246
    %1311 = vst [vmem:[%s4 + $0xf0] sm:$0xff] %v1247
    %1312 = vst [vmem:[%s4 + $0xf8] sm:$0xff] %v1248
    %1313 = vst [vmem:[%s4 + $0x100] sm:$0xff] %v1249
    %1314 = vst [vmem:[%s4 + $0x108] sm:$0xff] %v1250
    %1315 = vst [vmem:[%s4 + $0x110] sm:$0xff] %v1251
    %1316 = vst [vmem:[%s4 + $0x118] sm:$0xff] %v1252
    %1317 = vst [vmem:[%s4 + $0x120] sm:$0xff] %v1253
    %1318 = vst [vmem:[%s4 + $0x128] sm:$0xff] %v1254
    %1319 = vst [vmem:[%s4 + $0x130] sm:$0xff] %v1255
    %1320 = vst [vmem:[%s4 + $0x138] sm:$0xff] %v1256
    %1321 = vst [vmem:[%s4 + $0x140] sm:$0xff] %v1257
    %1322 = vst [vmem:[%s4 + $0x148] sm:$0xff] %v1258
    %1323 = vst [vmem:[%s4 + $0x150] sm:$0xff] %v1259
    %1324 = vst [vmem:[%s4 + $0x158] sm:$0xff] %v1260
    %1325 = vst [vmem:[%s4 + $0x160] sm:$0xff] %v1261
    %1326 = vst [vmem:[%s4 + $0x168] sm:$0xff] %v1262
    %1327 = vst [vmem:[%s4 + $0x170] sm:$0xff] %v1263
    %1328 = vst [vmem:[%s4 + $0x178] sm:$0xff] %v1264
    %1329 = vst [vmem:[%s4 + $0x180] sm:$0xff] %v1265
    %1330 = vst [vmem:[%s4 + $0x188] sm:$0xff] %v1266
    %1331 = vst [vmem:[%s4 + $0x190] sm:$0xff] %v1267
    %1332 = vst [vmem:[%s4 + $0x198] sm:$0xff] %v1268
    %1333 = vst [vmem:[%s4 + $0x1a0] sm:$0xff] %v1269
    %1334 = vst [vmem:[%s4 + $0x1a8] sm:$0xff] %v1270
    %1335 = vst [vmem:[%s4 + $0x1b0] sm:$0xff] %v1271
    %1336 = vst [vmem:[%s4 + $0x1b8] sm:$0xff] %v1272
    %1337 = vst [vmem:[%s4 + $0x1c0] sm:$0xff] %v1273
    %1338 = vst [vmem:[%s4 + $0x1c8] sm:$0xff] %v1274
    %1339 = vst [vmem:[%s4 + $0x1d0] sm:$0xff] %v1275
    %1340 = vst [vmem:[%s4 + $0x1d8] sm:$0xff] %v1276
    %1341 = vst [vmem:[%s4 + $0x1e0] sm:$0xff] %v1277
    %1342 = vst [vmem:[%s4 + $0x1e8] sm:$0xff] %v1278
    %1343 = vst [vmem:[%s4 + $0x1f0] sm:$0xff] %v1279
    %1344 = vst [vmem:[%s4 + $0x1f8] sm:$0xff] %v1280
  $region25: #{residual_block_forward.3} parent=0 // pred_fallthru
    _
  // Predicated region
  $region26: #{residual_block_forward.3} parent=0 // pred_check
    _
  $region27: #{residual_block_forward.3} parent=0 // pred_check_branch
    %1346 = sbr.rel (0) target = $region29
  $region28: #{residual_block_forward.3} parent=0 // pred_region
    _
  $region29: #{residual_block_forward.3} parent=0 // pred_fallthru
    _
  // Predicated region
  $region30: #{residual_block_forward.3} parent=0 // pred_check
    _
  $region31: #{residual_block_forward.3} parent=0 // pred_check_branch
    %1348 = sbr.rel (0) target = $region33
  $region32: #{residual_block_forward.3} parent=0 // pred_region
    _
  $region33: #{residual_block_forward.3} parent=0 // pred_fallthru
    _

</llo_original>
